<compile_context>
chip_gen: v7x
topology: tpu7x:2x2x1
jax: 0.10.0
libtpu: 0.0.40
codegen_flags: <defaults>
</compile_context>

<pallas_src>
import jax
import jax.numpy as jnp
import numpy as np
from jax.experimental import pallas as pl
from jax.experimental.pallas import tpu as pltpu

# ---------------------------------------------------------------------------
# Problem sizes (small, structure-consistent with the module)
# ---------------------------------------------------------------------------
N = 2            # batch
CIN = 3          # conv in channels
COUT = 16        # conv out channels
H = W = 16       # spatial (PyTorch module assumes 224; scaled down)
HP, WP = H // 2, W // 2
FEAT = COUT * HP * WP          # fc1 input features (16 * 8 * 8 = 1024)
NUM_CLASSES = 2

KCOL = 3 * CIN * W             # im2col K, rows ordered (dy, cin, w)   = 144
LANE = WP * COUT               # pooled lanes per row (wp, cout)       = 128
CONV_COLS = 2 * LANE           # conv-matmul lanes (jw, wp, cout)      = 256

# Static layout assumptions (fail loudly if the shape is changed, e.g. 224x224)
assert WP * COUT == LANE and LANE % 128 == 0, "w-pool lane-half trick needs LANE % 128 == 0"
assert CONV_COLS == 2 * LANE, "jw must be the outermost conv-column factor"
assert H % 2 == 0 and W % 2 == 0, "2x2/stride-2 pooling needs even spatial dims"


# ---------------------------------------------------------------------------
# Fused kernel: im2col -> conv matmul -> bias -> ReLU -> 2x2 maxpool -> FC
# ---------------------------------------------------------------------------
def fused_cnn_kernel(x_ref, wconv_ref, cbias_ref, wk_ref, fcb_ref,
                     out_ref, pat_ref):
    # x_ref:     (N, CIN, H, W)           NCHW input, exactly as PyTorch gives it
    # wconv_ref: (KCOL, CONV_COLS) bf16   banded conv weight, rows=(dy,cin,w),
    #                                     cols=(jw,wp,cout)
    # cbias_ref: (1, CONV_COLS)           conv bias tiled to the column layout
    # wk_ref:    (HP*NUM_CLASSES, LANE)   fc weight, rows=(hp,cls), lanes=(wp,cout)
    # fcb_ref:   (1, NUM_CLASSES)
    # out_ref:   (N, NUM_CLASSES)
    # pat_ref:   VMEM scratch (N*H, KCOL) -- im2col slab

    # --- zero only the h-halo rows the band copies below leave unwritten ----
    zrow = jnp.zeros((1, CIN * W), dtype=jnp.float32)
    for n in range(N):
        pat_ref[n * H:n * H + 1, 0:CIN * W] = zrow                      # dy=0, h=0
        pat_ref[n * H + H - 1:n * H + H, 2 * CIN * W:3 * CIN * W] = zrow  # dy=2, h=H-1

    # --- im2col: contiguous 16-lane band copies, columns ordered (dy,cin,w) -
    for dy in range(3):
        h_lo = max(0, 1 - dy)              # output rows with an in-bounds h read
        h_hi = min(H, H + 1 - dy)
        for cin in range(CIN):
            col = (dy * CIN + cin) * W
            for n in range(N):
                pat_ref[n * H + h_lo:n * H + h_hi, col:col + W] = (
                    x_ref[n, cin, h_lo + dy - 1:h_hi + dy - 1, :])

    # --- single conv matmul on the MXU: (N*H, 144) @ (144, 256) -------------
    wmat = wconv_ref[...].astype(jnp.float32)          # bf16 storage, f32 math
    acc = jnp.dot(pat_ref[...], wmat,
                  preferred_element_type=jnp.float32)  # (32, 256)
    acc = jnp.maximum(acc + cbias_ref[...], 0.0)       # bias + ReLU

    # --- 2x2 max pool, stride 2 (pure VPU) -----------------------------------
    # rows are (n, h): pool h-pairs via a leading split + max
    acc3 = acc.reshape(N * HP, 2, CONV_COLS)           # (16, 2, 256)
    hpool = jnp.max(acc3, axis=1)                      # (16, 256)
    # cols are (jw, wp, cout): pool w-pairs = max of the two 128-lane halves
    pooled = jnp.maximum(hpool[:, :LANE], hpool[:, LANE:])   # (16, 128)

    # --- fully connected: logits[n,cls] = sum_hp pooled[n,hp,:] . wk[hp,cls,:]
    p3 = pooled.reshape(N, HP, LANE)                   # (2, 8, 128)
    logits = jnp.zeros((N, NUM_CLASSES), dtype=jnp.float32)
    for hp in range(HP):
        wslab = wk_ref[hp * NUM_CLASSES:(hp + 1) * NUM_CLASSES, :]   # (2, 128)
        logits = logits + jnp.dot(p3[:, hp, :], wslab.T,
                                  preferred_element_type=jnp.float32)
    out_ref[...] = (logits + fcb_ref[...]).astype(out_ref.dtype)


# ---------------------------------------------------------------------------
# One-time parameter packing (PyTorch layouts -> kernel layouts)
# ---------------------------------------------------------------------------
def prepare_params(conv_w, conv_b, fc_w, fc_b):
    """Pack torch-layout params into the matrices the fused kernel consumes."""
    cw = np.asarray(conv_w, dtype=np.float32)   # (COUT, CIN, 3, 3)
    cb = np.asarray(conv_b, dtype=np.float32)   # (COUT,)
    fw = np.asarray(fc_w, dtype=np.float32)     # (NUM_CLASSES, FEAT), NCHW feature order
    fb = np.asarray(fc_b, dtype=np.float32)     # (NUM_CLASSES,)

    # Banded conv weight: row k = (dy*CIN + cin)*W + w   (w = unpadded input w)
    #                     col   = jw*LANE + wp*COUT + cout
    # Tap index dx = w - (2*wp + jw) + 1; taps that would read outside [0, W)
    # simply have no row, which reproduces the conv's zero padding in w.
    dy = np.arange(3)[:, None, None, None, None, None]
    ci = np.arange(CIN)[None, :, None, None, None, None]
    w_ = np.arange(W)[None, None, :, None, None, None]
    jw = np.arange(2)[None, None, None, :, None, None]
    wp = np.arange(WP)[None, None, None, None, :, None]
    co = np.arange(COUT)[None, None, None, None, None, :]
    dx = w_ - (2 * wp + jw) + 1
    valid = (dx >= 0) & (dx <= 2)
    wmat6 = np.where(valid, cw[co, ci, dy, np.clip(dx, 0, 2)], 0.0)
    wmat = jnp.asarray(wmat6.reshape(KCOL, CONV_COLS), dtype=jnp.bfloat16)

    # Conv bias tiled to the (jw, wp, cout) column layout.
    cbias = jnp.asarray(np.tile(cb, 2 * WP)[None, :], dtype=jnp.float32)  # (1, 256)

    # FC weight: rows = (hp, cls), lanes = (wp, cout) -- matches the pooled slab.
    hp = np.arange(HP)[:, None, None, None]
    cl = np.arange(NUM_CLASSES)[None, :, None, None]
    wp2 = np.arange(WP)[None, None, :, None]
    co2 = np.arange(COUT)[None, None, None, :]
    wk4 = fw[cl, co2 * (HP * WP) + hp * WP + wp2]        # (HP, NUM_CLASSES, WP, COUT)
    wk = jnp.asarray(wk4.reshape(HP * NUM_CLASSES, LANE), dtype=jnp.float32)

    fcb = jnp.asarray(fb[None, :], dtype=jnp.float32)    # (1, 2)
    return wmat, cbias, wk, fcb


# ---------------------------------------------------------------------------
# Full forward (takes NCHW like PyTorch, plus the packed params)
# ---------------------------------------------------------------------------
@jax.jit
def simple_cnn_cancer_forward(x_nchw, wmat, cbias, wk, fcb):
    return pl.pallas_call(
        fused_cnn_kernel,
        out_shape=jax.ShapeDtypeStruct((N, NUM_CLASSES), jnp.float32),
        grid_spec=pltpu.PrefetchScalarGridSpec(
            num_scalar_prefetch=0,
            grid=(1,),
            in_specs=[
                pl.BlockSpec((N, CIN, H, W), lambda i: (0, 0, 0, 0)),
                pl.BlockSpec((KCOL, CONV_COLS), lambda i: (0, 0)),
                pl.BlockSpec((1, CONV_COLS), lambda i: (0, 0)),
                pl.BlockSpec((HP * NUM_CLASSES, LANE), lambda i: (0, 0)),
                pl.BlockSpec((1, NUM_CLASSES), lambda i: (0, 0)),
            ],
            out_specs=pl.BlockSpec((N, NUM_CLASSES), lambda i: (0, 0)),
            scratch_shapes=[pltpu.VMEM((N * H, KCOL), jnp.float32)],
        ),
        compiler_params=pltpu.CompilerParams(
            dimension_semantics=("arbitrary",)),
    )(x_nchw, wmat, cbias, wk, fcb)


# ---------------------------------------------------------------------------
# Pure-JAX reference for verification (from the original torch-layout params)
# ---------------------------------------------------------------------------
def reference_forward(x_nchw, conv_w, conv_b, fc_w, fc_b):
    y = jax.lax.conv_general_dilated(
        x_nchw, conv_w, window_strides=(1, 1), padding="SAME",
        dimension_numbers=("NCHW", "OIHW", "NCHW"),
        precision=jax.lax.Precision.HIGHEST)
    y = y + conv_b[None, :, None, None]
    y = jnp.maximum(y, 0.0)
    y = jax.lax.reduce_window(y, -jnp.inf, jax.lax.max,
                              window_dimensions=(1, 1, 2, 2),
                              window_strides=(1, 1, 2, 2),
                              padding="VALID")
    flat = y.reshape(N, FEAT)                        # NCHW flatten, like torch
    return jnp.dot(flat, fc_w.T,
                   precision=jax.lax.Precision.HIGHEST) + fc_b


if __name__ == "__main__":
    key = jax.random.PRNGKey(0)
    k_x, k_cw, k_cb, k_fw, k_fb = jax.random.split(key, 5)

    x = jax.random.normal(k_x, (N, CIN, H, W), dtype=jnp.float32)
    conv_w = jax.random.normal(k_cw, (COUT, CIN, 3, 3), dtype=jnp.float32) * 0.1
    conv_b = jax.random.normal(k_cb, (COUT,), dtype=jnp.float32) * 0.1
    fc_w = jax.random.normal(k_fw, (NUM_CLASSES, FEAT), dtype=jnp.float32) * 0.01
    fc_b = jax.random.normal(k_fb, (NUM_CLASSES,), dtype=jnp.float32) * 0.01

    packed = prepare_params(conv_w, conv_b, fc_w, fc_b)   # done once, off-path
    out = simple_cnn_cancer_forward(x, *packed)
    out = jax.block_until_ready(out)

    ref = reference_forward(x, conv_w, conv_b, fc_w, fc_b)
    assert out.shape == (N, NUM_CLASSES)
    # Tolerance accounts for the bf16-stored (f32-computed) conv weight.
    assert jnp.allclose(out, ref, atol=2e-3, rtol=2e-3), (out, ref)

    print("KERNEL_OK")
</pallas_src>

<mosaic_0001>
module attributes {stable_mosaic.version = 11 : i64} {
  func.func @fused_cnn_kernel(%arg0: i32, %arg1: memref<2x3x16x16xf32, #tpu.memory_space<vmem>>, %arg2: memref<144x256xbf16, #tpu.memory_space<vmem>>, %arg3: memref<1x256xf32, #tpu.memory_space<vmem>>, %arg4: memref<16x128xf32, #tpu.memory_space<vmem>>, %arg5: memref<1x2xf32, #tpu.memory_space<vmem>>, %arg6: memref<2x2xf32, #tpu.memory_space<vmem>>, %arg7: memref<32x144xf32, #tpu.memory_space<vmem>>) attributes {dimension_semantics = [#tpu.dimension_semantics<arbitrary>], iteration_bounds = array<i64: 1>, scalar_prefetch = 0 : i64, scratch_operands = 1 : i64, tpu.core_type = #tpu.core_type<tc>, window_params = [{pipeline_mode = #tpu.pipeline_mode<synchronous>, transform_indices = @transform_0, window_bounds = array<i64: 2, 3, 16, 16>}, {pipeline_mode = #tpu.pipeline_mode<synchronous>, transform_indices = @transform_1, window_bounds = array<i64: 144, 256>}, {pipeline_mode = #tpu.pipeline_mode<synchronous>, transform_indices = @transform_2, window_bounds = array<i64: 1, 256>}, {pipeline_mode = #tpu.pipeline_mode<synchronous>, transform_indices = @transform_3, window_bounds = array<i64: 16, 128>}, {pipeline_mode = #tpu.pipeline_mode<synchronous>, transform_indices = @transform_4, window_bounds = array<i64: 1, 2>}, {pipeline_mode = #tpu.pipeline_mode<synchronous>, transform_indices = @transform_5, window_bounds = array<i64: 2, 2>}]} {
    %cst = arith.constant 0.000000e+00 : f32
    %0 = vector.broadcast %cst : f32 to vector<1x48xf32>
    %c0 = arith.constant 0 : index
    %c0_0 = arith.constant 0 : index
    %1 = vector.load %arg7[%c0, %c0_0] : memref<32x144xf32, #tpu.memory_space<vmem>>, vector<1x48xf32>
    tpu.vector_store %arg7[%c0, %c0_0], %0 {strides = array<i32>} : memref<32x144xf32, #tpu.memory_space<vmem>>, vector<1x48xf32>,
    %c15 = arith.constant 15 : index
    %c96 = arith.constant 96 : index
    %2 = vector.load %arg7[%c15, %c96] : memref<32x144xf32, #tpu.memory_space<vmem>>, vector<1x48xf32>
    tpu.vector_store %arg7[%c15, %c96], %0 {strides = array<i32>} : memref<32x144xf32, #tpu.memory_space<vmem>>, vector<1x48xf32>,
    %c16 = arith.constant 16 : index
    %c0_1 = arith.constant 0 : index
    %3 = vector.load %arg7[%c16, %c0_1] : memref<32x144xf32, #tpu.memory_space<vmem>>, vector<1x48xf32>
    tpu.vector_store %arg7[%c16, %c0_1], %0 {strides = array<i32>} : memref<32x144xf32, #tpu.memory_space<vmem>>, vector<1x48xf32>,
    %c31 = arith.constant 31 : index
    %c96_2 = arith.constant 96 : index
    %4 = vector.load %arg7[%c31, %c96_2] : memref<32x144xf32, #tpu.memory_space<vmem>>, vector<1x48xf32>
    tpu.vector_store %arg7[%c31, %c96_2], %0 {strides = array<i32>} : memref<32x144xf32, #tpu.memory_space<vmem>>, vector<1x48xf32>,
    %c0_3 = arith.constant 0 : index
    %c0_4 = arith.constant 0 : index
    %c0_5 = arith.constant 0 : index
    %c0_6 = arith.constant 0 : index
    %5 = vector.load %arg1[%c0_3, %c0_4, %c0_5, %c0_6] : memref<2x3x16x16xf32, #tpu.memory_space<vmem>>, vector<1x1x15x16xf32>
    %6 = vector.shape_cast %5 : vector<1x1x15x16xf32> to vector<15x16xf32>
    %c1 = arith.constant 1 : index
    %c0_7 = arith.constant 0 : index
    %7 = vector.load %arg7[%c1, %c0_7] : memref<32x144xf32, #tpu.memory_space<vmem>>, vector<15x16xf32>
    tpu.vector_store %arg7[%c1, %c0_7], %6 {strides = array<i32>} : memref<32x144xf32, #tpu.memory_space<vmem>>, vector<15x16xf32>,
    %c1_8 = arith.constant 1 : index
    %c0_9 = arith.constant 0 : index
    %c0_10 = arith.constant 0 : index
    %c0_11 = arith.constant 0 : index
    %8 = vector.load %arg1[%c1_8, %c0_9, %c0_10, %c0_11] : memref<2x3x16x16xf32, #tpu.memory_space<vmem>>, vector<1x1x15x16xf32>
    %9 = vector.shape_cast %8 : vector<1x1x15x16xf32> to vector<15x16xf32>
    %c17 = arith.constant 17 : index
    %c0_12 = arith.constant 0 : index
    %10 = vector.load %arg7[%c17, %c0_12] : memref<32x144xf32, #tpu.memory_space<vmem>>, vector<15x16xf32>
    tpu.vector_store %arg7[%c17, %c0_12], %9 {strides = array<i32>} : memref<32x144xf32, #tpu.memory_space<vmem>>, vector<15x16xf32>,
    %c0_13 = arith.constant 0 : index
    %c1_14 = arith.constant 1 : index
    %c0_15 = arith.constant 0 : index
    %c0_16 = arith.constant 0 : index
    %11 = vector.load %arg1[%c0_13, %c1_14, %c0_15, %c0_16] : memref<2x3x16x16xf32, #tpu.memory_space<vmem>>, vector<1x1x15x16xf32>
    %12 = vector.shape_cast %11 : vector<1x1x15x16xf32> to vector<15x16xf32>
    %c1_17 = arith.constant 1 : index
    %c16_18 = arith.constant 16 : index
    %13 = vector.load %arg7[%c1_17, %c16_18] : memref<32x144xf32, #tpu.memory_space<vmem>>, vector<15x16xf32>
    tpu.vector_store %arg7[%c1_17, %c16_18], %12 {strides = array<i32>} : memref<32x144xf32, #tpu.memory_space<vmem>>, vector<15x16xf32>,
    %c1_19 = arith.constant 1 : index
    %c1_20 = arith.constant 1 : index
    %c0_21 = arith.constant 0 : index
    %c0_22 = arith.constant 0 : index
    %14 = vector.load %arg1[%c1_19, %c1_20, %c0_21, %c0_22] : memref<2x3x16x16xf32, #tpu.memory_space<vmem>>, vector<1x1x15x16xf32>
    %15 = vector.shape_cast %14 : vector<1x1x15x16xf32> to vector<15x16xf32>
    %c17_23 = arith.constant 17 : index
    %c16_24 = arith.constant 16 : index
    %16 = vector.load %arg7[%c17_23, %c16_24] : memref<32x144xf32, #tpu.memory_space<vmem>>, vector<15x16xf32>
    tpu.vector_store %arg7[%c17_23, %c16_24], %15 {strides = array<i32>} : memref<32x144xf32, #tpu.memory_space<vmem>>, vector<15x16xf32>,
    %c0_25 = arith.constant 0 : index
    %c2 = arith.constant 2 : index
    %c0_26 = arith.constant 0 : index
    %c0_27 = arith.constant 0 : index
    %17 = vector.load %arg1[%c0_25, %c2, %c0_26, %c0_27] : memref<2x3x16x16xf32, #tpu.memory_space<vmem>>, vector<1x1x15x16xf32>
    %18 = vector.shape_cast %17 : vector<1x1x15x16xf32> to vector<15x16xf32>
    %c1_28 = arith.constant 1 : index
    %c32 = arith.constant 32 : index
    %19 = vector.load %arg7[%c1_28, %c32] : memref<32x144xf32, #tpu.memory_space<vmem>>, vector<15x16xf32>
    tpu.vector_store %arg7[%c1_28, %c32], %18 {strides = array<i32>} : memref<32x144xf32, #tpu.memory_space<vmem>>, vector<15x16xf32>,
    %c1_29 = arith.constant 1 : index
    %c2_30 = arith.constant 2 : index
    %c0_31 = arith.constant 0 : index
    %c0_32 = arith.constant 0 : index
    %20 = vector.load %arg1[%c1_29, %c2_30, %c0_31, %c0_32] : memref<2x3x16x16xf32, #tpu.memory_space<vmem>>, vector<1x1x15x16xf32>
    %21 = vector.shape_cast %20 : vector<1x1x15x16xf32> to vector<15x16xf32>
    %c17_33 = arith.constant 17 : index
    %c32_34 = arith.constant 32 : index
    %22 = vector.load %arg7[%c17_33, %c32_34] : memref<32x144xf32, #tpu.memory_space<vmem>>, vector<15x16xf32>
    tpu.vector_store %arg7[%c17_33, %c32_34], %21 {strides = array<i32>} : memref<32x144xf32, #tpu.memory_space<vmem>>, vector<15x16xf32>,
    %c0_35 = arith.constant 0 : index
    %c0_36 = arith.constant 0 : index
    %c0_37 = arith.constant 0 : index
    %c0_38 = arith.constant 0 : index
    %23 = vector.load %arg1[%c0_35, %c0_36, %c0_37, %c0_38] : memref<2x3x16x16xf32, #tpu.memory_space<vmem>>, vector<1x1x16x16xf32>
    %24 = vector.shape_cast %23 : vector<1x1x16x16xf32> to vector<16x16xf32>
    %c0_39 = arith.constant 0 : index
    %c48 = arith.constant 48 : index
    %25 = vector.load %arg7[%c0_39, %c48] : memref<32x144xf32, #tpu.memory_space<vmem>>, vector<16x16xf32>
    tpu.vector_store %arg7[%c0_39, %c48], %24 {strides = array<i32>} : memref<32x144xf32, #tpu.memory_space<vmem>>, vector<16x16xf32>,
    %c1_40 = arith.constant 1 : index
    %c0_41 = arith.constant 0 : index
    %c0_42 = arith.constant 0 : index
    %c0_43 = arith.constant 0 : index
    %26 = vector.load %arg1[%c1_40, %c0_41, %c0_42, %c0_43] : memref<2x3x16x16xf32, #tpu.memory_space<vmem>>, vector<1x1x16x16xf32>
    %27 = vector.shape_cast %26 : vector<1x1x16x16xf32> to vector<16x16xf32>
    %c16_44 = arith.constant 16 : index
    %c48_45 = arith.constant 48 : index
    %28 = vector.load %arg7[%c16_44, %c48_45] : memref<32x144xf32, #tpu.memory_space<vmem>>, vector<16x16xf32>
    tpu.vector_store %arg7[%c16_44, %c48_45], %27 {strides = array<i32>} : memref<32x144xf32, #tpu.memory_space<vmem>>, vector<16x16xf32>,
    %c0_46 = arith.constant 0 : index
    %c1_47 = arith.constant 1 : index
    %c0_48 = arith.constant 0 : index
    %c0_49 = arith.constant 0 : index
    %29 = vector.load %arg1[%c0_46, %c1_47, %c0_48, %c0_49] : memref<2x3x16x16xf32, #tpu.memory_space<vmem>>, vector<1x1x16x16xf32>
    %30 = vector.shape_cast %29 : vector<1x1x16x16xf32> to vector<16x16xf32>
    %c0_50 = arith.constant 0 : index
    %c64 = arith.constant 64 : index
    %31 = vector.load %arg7[%c0_50, %c64] : memref<32x144xf32, #tpu.memory_space<vmem>>, vector<16x16xf32>
    tpu.vector_store %arg7[%c0_50, %c64], %30 {strides = array<i32>} : memref<32x144xf32, #tpu.memory_space<vmem>>, vector<16x16xf32>,
    %c1_51 = arith.constant 1 : index
    %c1_52 = arith.constant 1 : index
    %c0_53 = arith.constant 0 : index
    %c0_54 = arith.constant 0 : index
    %32 = vector.load %arg1[%c1_51, %c1_52, %c0_53, %c0_54] : memref<2x3x16x16xf32, #tpu.memory_space<vmem>>, vector<1x1x16x16xf32>
    %33 = vector.shape_cast %32 : vector<1x1x16x16xf32> to vector<16x16xf32>
    %c16_55 = arith.constant 16 : index
    %c64_56 = arith.constant 64 : index
    %34 = vector.load %arg7[%c16_55, %c64_56] : memref<32x144xf32, #tpu.memory_space<vmem>>, vector<16x16xf32>
    tpu.vector_store %arg7[%c16_55, %c64_56], %33 {strides = array<i32>} : memref<32x144xf32, #tpu.memory_space<vmem>>, vector<16x16xf32>,
    %c0_57 = arith.constant 0 : index
    %c2_58 = arith.constant 2 : index
    %c0_59 = arith.constant 0 : index
    %c0_60 = arith.constant 0 : index
    %35 = vector.load %arg1[%c0_57, %c2_58, %c0_59, %c0_60] : memref<2x3x16x16xf32, #tpu.memory_space<vmem>>, vector<1x1x16x16xf32>
    %36 = vector.shape_cast %35 : vector<1x1x16x16xf32> to vector<16x16xf32>
    %c0_61 = arith.constant 0 : index
    %c80 = arith.constant 80 : index
    %37 = vector.load %arg7[%c0_61, %c80] : memref<32x144xf32, #tpu.memory_space<vmem>>, vector<16x16xf32>
    tpu.vector_store %arg7[%c0_61, %c80], %36 {strides = array<i32>} : memref<32x144xf32, #tpu.memory_space<vmem>>, vector<16x16xf32>,
    %c1_62 = arith.constant 1 : index
    %c2_63 = arith.constant 2 : index
    %c0_64 = arith.constant 0 : index
    %c0_65 = arith.constant 0 : index
    %38 = vector.load %arg1[%c1_62, %c2_63, %c0_64, %c0_65] : memref<2x3x16x16xf32, #tpu.memory_space<vmem>>, vector<1x1x16x16xf32>
    %39 = vector.shape_cast %38 : vector<1x1x16x16xf32> to vector<16x16xf32>
    %c16_66 = arith.constant 16 : index
    %c80_67 = arith.constant 80 : index
    %40 = vector.load %arg7[%c16_66, %c80_67] : memref<32x144xf32, #tpu.memory_space<vmem>>, vector<16x16xf32>
    tpu.vector_store %arg7[%c16_66, %c80_67], %39 {strides = array<i32>} : memref<32x144xf32, #tpu.memory_space<vmem>>, vector<16x16xf32>,
    %c0_68 = arith.constant 0 : index
    %c0_69 = arith.constant 0 : index
    %c1_70 = arith.constant 1 : index
    %c0_71 = arith.constant 0 : index
    %41 = vector.load %arg1[%c0_68, %c0_69, %c1_70, %c0_71] : memref<2x3x16x16xf32, #tpu.memory_space<vmem>>, vector<1x1x15x16xf32>
    %42 = vector.shape_cast %41 : vector<1x1x15x16xf32> to vector<15x16xf32>
    %c0_72 = arith.constant 0 : index
    %c96_73 = arith.constant 96 : index
    %43 = vector.load %arg7[%c0_72, %c96_73] : memref<32x144xf32, #tpu.memory_space<vmem>>, vector<15x16xf32>
    tpu.vector_store %arg7[%c0_72, %c96_73], %42 {strides = array<i32>} : memref<32x144xf32, #tpu.memory_space<vmem>>, vector<15x16xf32>,
    %c1_74 = arith.constant 1 : index
    %c0_75 = arith.constant 0 : index
    %c1_76 = arith.constant 1 : index
    %c0_77 = arith.constant 0 : index
    %44 = vector.load %arg1[%c1_74, %c0_75, %c1_76, %c0_77] : memref<2x3x16x16xf32, #tpu.memory_space<vmem>>, vector<1x1x15x16xf32>
    %45 = vector.shape_cast %44 : vector<1x1x15x16xf32> to vector<15x16xf32>
    %c16_78 = arith.constant 16 : index
    %c96_79 = arith.constant 96 : index
    %46 = vector.load %arg7[%c16_78, %c96_79] : memref<32x144xf32, #tpu.memory_space<vmem>>, vector<15x16xf32>
    tpu.vector_store %arg7[%c16_78, %c96_79], %45 {strides = array<i32>} : memref<32x144xf32, #tpu.memory_space<vmem>>, vector<15x16xf32>,
    %c0_80 = arith.constant 0 : index
    %c1_81 = arith.constant 1 : index
    %c1_82 = arith.constant 1 : index
    %c0_83 = arith.constant 0 : index
    %47 = vector.load %arg1[%c0_80, %c1_81, %c1_82, %c0_83] : memref<2x3x16x16xf32, #tpu.memory_space<vmem>>, vector<1x1x15x16xf32>
    %48 = vector.shape_cast %47 : vector<1x1x15x16xf32> to vector<15x16xf32>
    %c0_84 = arith.constant 0 : index
    %c112 = arith.constant 112 : index
    %49 = vector.load %arg7[%c0_84, %c112] : memref<32x144xf32, #tpu.memory_space<vmem>>, vector<15x16xf32>
    tpu.vector_store %arg7[%c0_84, %c112], %48 {strides = array<i32>} : memref<32x144xf32, #tpu.memory_space<vmem>>, vector<15x16xf32>,
    %c1_85 = arith.constant 1 : index
    %c1_86 = arith.constant 1 : index
    %c1_87 = arith.constant 1 : index
    %c0_88 = arith.constant 0 : index
    %50 = vector.load %arg1[%c1_85, %c1_86, %c1_87, %c0_88] : memref<2x3x16x16xf32, #tpu.memory_space<vmem>>, vector<1x1x15x16xf32>
    %51 = vector.shape_cast %50 : vector<1x1x15x16xf32> to vector<15x16xf32>
    %c16_89 = arith.constant 16 : index
    %c112_90 = arith.constant 112 : index
    %52 = vector.load %arg7[%c16_89, %c112_90] : memref<32x144xf32, #tpu.memory_space<vmem>>, vector<15x16xf32>
    tpu.vector_store %arg7[%c16_89, %c112_90], %51 {strides = array<i32>} : memref<32x144xf32, #tpu.memory_space<vmem>>, vector<15x16xf32>,
    %c0_91 = arith.constant 0 : index
    %c2_92 = arith.constant 2 : index
    %c1_93 = arith.constant 1 : index
    %c0_94 = arith.constant 0 : index
    %53 = vector.load %arg1[%c0_91, %c2_92, %c1_93, %c0_94] : memref<2x3x16x16xf32, #tpu.memory_space<vmem>>, vector<1x1x15x16xf32>
    %54 = vector.shape_cast %53 : vector<1x1x15x16xf32> to vector<15x16xf32>
    %c0_95 = arith.constant 0 : index
    %c128 = arith.constant 128 : index
    %55 = vector.load %arg7[%c0_95, %c128] : memref<32x144xf32, #tpu.memory_space<vmem>>, vector<15x16xf32>
    tpu.vector_store %arg7[%c0_95, %c128], %54 {strides = array<i32>} : memref<32x144xf32, #tpu.memory_space<vmem>>, vector<15x16xf32>,
    %c1_96 = arith.constant 1 : index
    %c2_97 = arith.constant 2 : index
    %c1_98 = arith.constant 1 : index
    %c0_99 = arith.constant 0 : index
    %56 = vector.load %arg1[%c1_96, %c2_97, %c1_98, %c0_99] : memref<2x3x16x16xf32, #tpu.memory_space<vmem>>, vector<1x1x15x16xf32>
    %57 = vector.shape_cast %56 : vector<1x1x15x16xf32> to vector<15x16xf32>
    %c16_100 = arith.constant 16 : index
    %c128_101 = arith.constant 128 : index
    %58 = vector.load %arg7[%c16_100, %c128_101] : memref<32x144xf32, #tpu.memory_space<vmem>>, vector<15x16xf32>
    tpu.vector_store %arg7[%c16_100, %c128_101], %57 {strides = array<i32>} : memref<32x144xf32, #tpu.memory_space<vmem>>, vector<15x16xf32>,
    %c0_102 = arith.constant 0 : index
    %c0_103 = arith.constant 0 : index
    %59 = vector.load %arg2[%c0_102, %c0_103] : memref<144x256xbf16, #tpu.memory_space<vmem>>, vector<144x256xbf16>
    %60 = arith.extf %59 : vector<144x256xbf16> to vector<144x256xf32>
    %c0_104 = arith.constant 0 : index
    %c0_105 = arith.constant 0 : index
    %61 = vector.load %arg7[%c0_104, %c0_105] : memref<32x144xf32, #tpu.memory_space<vmem>>, vector<32x144xf32>
    %cst_106 = arith.constant dense<0.000000e+00> : vector<32x256xf32>
    %62 = tpu.matmul %61, %60, %cst_106 {dimension_numbers = #tpu.dot_dimension_numbers<[1], [0], [0], [1], [0, 0, 1, 1], [], []>} : vector<32x144xf32>, vector<144x256xf32>, vector<32x256xf32> -> vector<32x256xf32>
    %c0_107 = arith.constant 0 : index
    %c0_108 = arith.constant 0 : index
    %63 = vector.load %arg3[%c0_107, %c0_108] : memref<1x256xf32, #tpu.memory_space<vmem>>, vector<1x256xf32>
    %64 = vector.broadcast %63 : vector<1x256xf32> to vector<32x256xf32>
    %65 = arith.addf %62, %64 : vector<32x256xf32>
    %cst_109 = arith.constant 0.000000e+00 : f32
    %66 = vector.broadcast %cst_109 : f32 to vector<32x256xf32>
    %67 = arith.maximumf %65, %66 : vector<32x256xf32>
    %68 = vector.shape_cast %67 : vector<32x256xf32> to vector<16x2x256xf32>
    %cst_110 = arith.constant dense<0xFF800000> : vector<16x256xf32>
    %69 = vector.multi_reduction <maximumf>, %68, %cst_110 [1] : vector<16x2x256xf32> to vector<16x256xf32>
    %70 = vector.extract_strided_slice %69 {offsets = [0, 0], sizes = [16, 128], strides = [1, 1]} : vector<16x256xf32> to vector<16x128xf32>
    %71 = vector.extract_strided_slice %69 {offsets = [0, 128], sizes = [16, 128], strides = [1, 1]} : vector<16x256xf32> to vector<16x128xf32>
    %72 = arith.maximumf %70, %71 : vector<16x128xf32>
    %73 = vector.shape_cast %72 : vector<16x128xf32> to vector<2x8x128xf32>
    %cst_111 = arith.constant 0.000000e+00 : f32
    %74 = vector.broadcast %cst_111 : f32 to vector<2x2xf32>
    %c0_112 = arith.constant 0 : index
    %c0_113 = arith.constant 0 : index
    %75 = vector.load %arg4[%c0_112, %c0_113] : memref<16x128xf32, #tpu.memory_space<vmem>>, vector<2x128xf32>
    %76 = vector.extract_strided_slice %73 {offsets = [0, 0, 0], sizes = [2, 1, 128], strides = [1, 1, 1]} : vector<2x8x128xf32> to vector<2x1x128xf32>
    %77 = vector.shape_cast %76 : vector<2x1x128xf32> to vector<2x128xf32>
    %78 = tpu.transpose %75, [1, 0] : vector<2x128xf32> -> vector<128x2xf32>
    %cst_114 = arith.constant dense<0.000000e+00> : vector<2x2xf32>
    %79 = tpu.matmul %77, %78, %cst_114 {dimension_numbers = #tpu.dot_dimension_numbers<[1], [0], [0], [1], [0, 0, 1, 1], [], []>} : vector<2x128xf32>, vector<128x2xf32>, vector<2x2xf32> -> vector<2x2xf32>
    %80 = arith.addf %74, %79 : vector<2x2xf32>
    %c2_115 = arith.constant 2 : index
    %c0_116 = arith.constant 0 : index
    %81 = vector.load %arg4[%c2_115, %c0_116] : memref<16x128xf32, #tpu.memory_space<vmem>>, vector<2x128xf32>
    %82 = vector.extract_strided_slice %73 {offsets = [0, 1, 0], sizes = [2, 1, 128], strides = [1, 1, 1]} : vector<2x8x128xf32> to vector<2x1x128xf32>
    %83 = vector.shape_cast %82 : vector<2x1x128xf32> to vector<2x128xf32>
    %84 = tpu.transpose %81, [1, 0] : vector<2x128xf32> -> vector<128x2xf32>
    %cst_117 = arith.constant dense<0.000000e+00> : vector<2x2xf32>
    %85 = tpu.matmul %83, %84, %cst_117 {dimension_numbers = #tpu.dot_dimension_numbers<[1], [0], [0], [1], [0, 0, 1, 1], [], []>} : vector<2x128xf32>, vector<128x2xf32>, vector<2x2xf32> -> vector<2x2xf32>
    %86 = arith.addf %80, %85 : vector<2x2xf32>
    %c4 = arith.constant 4 : index
    %c0_118 = arith.constant 0 : index
    %87 = vector.load %arg4[%c4, %c0_118] : memref<16x128xf32, #tpu.memory_space<vmem>>, vector<2x128xf32>
    %88 = vector.extract_strided_slice %73 {offsets = [0, 2, 0], sizes = [2, 1, 128], strides = [1, 1, 1]} : vector<2x8x128xf32> to vector<2x1x128xf32>
    %89 = vector.shape_cast %88 : vector<2x1x128xf32> to vector<2x128xf32>
    %90 = tpu.transpose %87, [1, 0] : vector<2x128xf32> -> vector<128x2xf32>
    %cst_119 = arith.constant dense<0.000000e+00> : vector<2x2xf32>
    %91 = tpu.matmul %89, %90, %cst_119 {dimension_numbers = #tpu.dot_dimension_numbers<[1], [0], [0], [1], [0, 0, 1, 1], [], []>} : vector<2x128xf32>, vector<128x2xf32>, vector<2x2xf32> -> vector<2x2xf32>
    %92 = arith.addf %86, %91 : vector<2x2xf32>
    %c6 = arith.constant 6 : index
    %c0_120 = arith.constant 0 : index
    %93 = vector.load %arg4[%c6, %c0_120] : memref<16x128xf32, #tpu.memory_space<vmem>>, vector<2x128xf32>
    %94 = vector.extract_strided_slice %73 {offsets = [0, 3, 0], sizes = [2, 1, 128], strides = [1, 1, 1]} : vector<2x8x128xf32> to vector<2x1x128xf32>
    %95 = vector.shape_cast %94 : vector<2x1x128xf32> to vector<2x128xf32>
    %96 = tpu.transpose %93, [1, 0] : vector<2x128xf32> -> vector<128x2xf32>
    %cst_121 = arith.constant dense<0.000000e+00> : vector<2x2xf32>
    %97 = tpu.matmul %95, %96, %cst_121 {dimension_numbers = #tpu.dot_dimension_numbers<[1], [0], [0], [1], [0, 0, 1, 1], [], []>} : vector<2x128xf32>, vector<128x2xf32>, vector<2x2xf32> -> vector<2x2xf32>
    %98 = arith.addf %92, %97 : vector<2x2xf32>
    %c8 = arith.constant 8 : index
    %c0_122 = arith.constant 0 : index
    %99 = vector.load %arg4[%c8, %c0_122] : memref<16x128xf32, #tpu.memory_space<vmem>>, vector<2x128xf32>
    %100 = vector.extract_strided_slice %73 {offsets = [0, 4, 0], sizes = [2, 1, 128], strides = [1, 1, 1]} : vector<2x8x128xf32> to vector<2x1x128xf32>
    %101 = vector.shape_cast %100 : vector<2x1x128xf32> to vector<2x128xf32>
    %102 = tpu.transpose %99, [1, 0] : vector<2x128xf32> -> vector<128x2xf32>
    %cst_123 = arith.constant dense<0.000000e+00> : vector<2x2xf32>
    %103 = tpu.matmul %101, %102, %cst_123 {dimension_numbers = #tpu.dot_dimension_numbers<[1], [0], [0], [1], [0, 0, 1, 1], [], []>} : vector<2x128xf32>, vector<128x2xf32>, vector<2x2xf32> -> vector<2x2xf32>
    %104 = arith.addf %98, %103 : vector<2x2xf32>
    %c10 = arith.constant 10 : index
    %c0_124 = arith.constant 0 : index
    %105 = vector.load %arg4[%c10, %c0_124] : memref<16x128xf32, #tpu.memory_space<vmem>>, vector<2x128xf32>
    %106 = vector.extract_strided_slice %73 {offsets = [0, 5, 0], sizes = [2, 1, 128], strides = [1, 1, 1]} : vector<2x8x128xf32> to vector<2x1x128xf32>
    %107 = vector.shape_cast %106 : vector<2x1x128xf32> to vector<2x128xf32>
    %108 = tpu.transpose %105, [1, 0] : vector<2x128xf32> -> vector<128x2xf32>
    %cst_125 = arith.constant dense<0.000000e+00> : vector<2x2xf32>
    %109 = tpu.matmul %107, %108, %cst_125 {dimension_numbers = #tpu.dot_dimension_numbers<[1], [0], [0], [1], [0, 0, 1, 1], [], []>} : vector<2x128xf32>, vector<128x2xf32>, vector<2x2xf32> -> vector<2x2xf32>
    %110 = arith.addf %104, %109 : vector<2x2xf32>
    %c12 = arith.constant 12 : index
    %c0_126 = arith.constant 0 : index
    %111 = vector.load %arg4[%c12, %c0_126] : memref<16x128xf32, #tpu.memory_space<vmem>>, vector<2x128xf32>
    %112 = vector.extract_strided_slice %73 {offsets = [0, 6, 0], sizes = [2, 1, 128], strides = [1, 1, 1]} : vector<2x8x128xf32> to vector<2x1x128xf32>
    %113 = vector.shape_cast %112 : vector<2x1x128xf32> to vector<2x128xf32>
    %114 = tpu.transpose %111, [1, 0] : vector<2x128xf32> -> vector<128x2xf32>
    %cst_127 = arith.constant dense<0.000000e+00> : vector<2x2xf32>
    %115 = tpu.matmul %113, %114, %cst_127 {dimension_numbers = #tpu.dot_dimension_numbers<[1], [0], [0], [1], [0, 0, 1, 1], [], []>} : vector<2x128xf32>, vector<128x2xf32>, vector<2x2xf32> -> vector<2x2xf32>
    %116 = arith.addf %110, %115 : vector<2x2xf32>
    %c14 = arith.constant 14 : index
    %c0_128 = arith.constant 0 : index
    %117 = vector.load %arg4[%c14, %c0_128] : memref<16x128xf32, #tpu.memory_space<vmem>>, vector<2x128xf32>
    %118 = vector.extract_strided_slice %73 {offsets = [0, 7, 0], sizes = [2, 1, 128], strides = [1, 1, 1]} : vector<2x8x128xf32> to vector<2x1x128xf32>
    %119 = vector.shape_cast %118 : vector<2x1x128xf32> to vector<2x128xf32>
    %120 = tpu.transpose %117, [1, 0] : vector<2x128xf32> -> vector<128x2xf32>
    %cst_129 = arith.constant dense<0.000000e+00> : vector<2x2xf32>
    %121 = tpu.matmul %119, %120, %cst_129 {dimension_numbers = #tpu.dot_dimension_numbers<[1], [0], [0], [1], [0, 0, 1, 1], [], []>} : vector<2x128xf32>, vector<128x2xf32>, vector<2x2xf32> -> vector<2x2xf32>
    %122 = arith.addf %116, %121 : vector<2x2xf32>
    %c0_130 = arith.constant 0 : index
    %c0_131 = arith.constant 0 : index
    %123 = vector.load %arg5[%c0_130, %c0_131] : memref<1x2xf32, #tpu.memory_space<vmem>>, vector<1x2xf32>
    %124 = vector.broadcast %123 : vector<1x2xf32> to vector<2x2xf32>
    %125 = arith.addf %122, %124 : vector<2x2xf32>
    %c0_132 = arith.constant 0 : index
    %c0_133 = arith.constant 0 : index
    %126 = vector.load %arg6[%c0_132, %c0_133] : memref<2x2xf32, #tpu.memory_space<vmem>>, vector<2x2xf32>
    tpu.vector_store %arg6[%c0_132, %c0_133], %125 {strides = array<i32>} : memref<2x2xf32, #tpu.memory_space<vmem>>, vector<2x2xf32>,
    return
  }
  func.func @transform_0(%arg0: i32) -> (i32, i32, i32, i32) {
    %c0_i32 = arith.constant 0 : i32
    %c0_i32_0 = arith.constant 0 : i32
    %c0_i32_1 = arith.constant 0 : i32
    %c0_i32_2 = arith.constant 0 : i32
    %c0_i32_3 = arith.constant 0 : i32
    return %c0_i32, %c0_i32_0, %c0_i32_1, %c0_i32_2 : i32, i32, i32, i32
  }
  func.func @transform_1(%arg0: i32) -> (i32, i32) {
    %c0_i32 = arith.constant 0 : i32
    %c0_i32_0 = arith.constant 0 : i32
    %c0_i32_1 = arith.constant 0 : i32
    return %c0_i32, %c0_i32_0 : i32, i32
  }
  func.func @transform_2(%arg0: i32) -> (i32, i32) {
    %c0_i32 = arith.constant 0 : i32
    %c0_i32_0 = arith.constant 0 : i32
    %c0_i32_1 = arith.constant 0 : i32
    return %c0_i32, %c0_i32_0 : i32, i32
  }
  func.func @transform_3(%arg0: i32) -> (i32, i32) {
    %c0_i32 = arith.constant 0 : i32
    %c0_i32_0 = arith.constant 0 : i32
    %c0_i32_1 = arith.constant 0 : i32
    return %c0_i32, %c0_i32_0 : i32, i32
  }
  func.func @transform_4(%arg0: i32) -> (i32, i32) {
    %c0_i32 = arith.constant 0 : i32
    %c0_i32_0 = arith.constant 0 : i32
    %c0_i32_1 = arith.constant 0 : i32
    return %c0_i32, %c0_i32_0 : i32, i32
  }
  func.func @transform_5(%arg0: i32) -> (i32, i32) {
    %c0_i32 = arith.constant 0 : i32
    %c0_i32_0 = arith.constant 0 : i32
    %c0_i32_1 = arith.constant 0 : i32
    return %c0_i32, %c0_i32_0 : i32, i32
  }
}

</mosaic_0001>

<llo_original>
// kernel: simple_cnn_cancer_forward.1
$region0: #{simple_cnn_cancer_forward.1}
  #allocation0 [shape = 'u32[]', space=smem, size = 0x4, offset = 0x4, fixed_abs, tag = 'smem constant byte address 0x4 - core index']
  #allocation1 [shape = 'u32[144,128]{1,0:T(1,128)}', space=vmem, size = 0x12000, scoped, tag = 'internal scratch']
  #allocation2 [shape = 'f32[32,144]{1,0:T(8,128)}', space=vmem, size = 0x8000, scoped, tag = 'scratch operand']
  %s0 = inlined_call_operand.hbm [shape: f32[2,3,16,16], index: 0, kind: input, shape index: {}]
  %s1 = inlined_call_operand.hbm [shape: bf16[144,256], index: 1, kind: input, shape index: {}]
  %s2 = inlined_call_operand.vmem [shape: f32[1,256], index: 2, kind: input, shape index: {}]
  %s3 = inlined_call_operand.hbm [shape: f32[16,128], index: 3, kind: input, shape index: {}]
  %s4 = inlined_call_operand.vmem [shape: f32[1,2], index: 4, kind: input, shape index: {}]
  %s5 = inlined_call_operand.hbm [shape: f32[2,2], index: 5, kind: output, shape index: {}]
  %s6 = sld [smem:[#allocation0]]
  $region42: #{simple_cnn_cancer_forward.1} parent=0
    _
  %s8 = ssub.s32 1, %s6
  %s9 = scalar_select 0, %s8, %s6
  $region1: #{simple_cnn_cancer_forward.1} parent=0
    #allocation3 [shape = 'u8[49152]{0}', space=vmem, size = 0xc000, scoped, tag = 'input window, operand 0, single buffered']
    #allocation4 [shape = 's32[1]{0}', space=sflag, size = 0x4, scoped, tag = 'scoped memory for simple_cnn_cancer_forward.1']
    #allocation5 [shape = 's32[1]{0}', space=sflag, size = 0x4, scoped, tag = 'scoped memory for simple_cnn_cancer_forward.1']
    #allocation6 [shape = 'u8[73728]{0}', space=vmem, size = 0x12000, scoped, tag = 'input window, operand 1, single buffered']
    #allocation7 [shape = 's32[1]{0}', space=sflag, size = 0x4, scoped, tag = 'scoped memory for simple_cnn_cancer_forward.1']
    #allocation8 [shape = 'u8[8192]{0}', space=vmem, size = 0x2000, scoped, tag = 'input window, operand 3, single buffered']
    #allocation9 [shape = 'u8[1024]{0}', space=vmem, size = 0x400, scoped, tag = 'output window, operand 0, single buffered']
    %10 = vsyncpa [#allocation4], 0
    %11 = vsyncpa [#allocation7], 0
    %12 = vsyncpa [#allocation5], 0
    // Predicated region
    $region2: #{simple_cnn_cancer_forward.1} parent=1 // pred_check
      _
    $region3: #{simple_cnn_cancer_forward.1} parent=1 // pred_check_branch
      %14 = sbr.rel (0) target = $region5
    $region4: #{simple_cnn_cancer_forward.1} parent=1 // pred_region
      %s16 = ssub.s32 1536, 1536
      %17 = vsyncadd [#allocation4], %s16
      %s18 = sshll.u32 [#allocation3], 4
      %s19 = int_to_ptr.vmem [resolvable:$true] %s18
      %24 = dma.hbm_to_vmem [thread:$0]  %s0, 1536, %s19, [#allocation4], 128, 128, 8
    $region5: #{simple_cnn_cancer_forward.1} parent=1 // pred_fallthru
      _
    // Predicated region
    $region6: #{simple_cnn_cancer_forward.1} parent=1 // pred_check
      _
    $region7: #{simple_cnn_cancer_forward.1} parent=1 // pred_check_branch
      %26 = sbr.rel (0) target = $region9
    $region8: #{simple_cnn_cancer_forward.1} parent=1 // pred_region
      %s28 = ssub.s32 2304, 2304
      %29 = vsyncadd [#allocation7], %s28
      %s30 = sshll.u32 [#allocation6], 4
      %s31 = int_to_ptr.vmem [resolvable:$true] %s30
      %36 = dma.hbm_to_vmem [thread:$0]  %s1, 2304, %s31, [#allocation7], 128, 128, 8
    $region9: #{simple_cnn_cancer_forward.1} parent=1 // pred_fallthru
      _
    // Predicated region
    $region10: #{simple_cnn_cancer_forward.1} parent=1 // pred_check
      _
    $region11: #{simple_cnn_cancer_forward.1} parent=1 // pred_check_branch
      %38 = sbr.rel (0) target = $region13
    $region12: #{simple_cnn_cancer_forward.1} parent=1 // pred_region
      _
    $region13: #{simple_cnn_cancer_forward.1} parent=1 // pred_fallthru
      _
    // Predicated region
    $region14: #{simple_cnn_cancer_forward.1} parent=1 // pred_check
      _
    $region15: #{simple_cnn_cancer_forward.1} parent=1 // pred_check_branch
      %40 = sbr.rel (0) target = $region17
    $region16: #{simple_cnn_cancer_forward.1} parent=1 // pred_region
      %s42 = ssub.s32 256, 256
      %43 = vsyncadd [#allocation7], %s42
      %s44 = sshll.u32 [#allocation8], 4
      %s45 = int_to_ptr.vmem [resolvable:$true] %s44
      %50 = dma.hbm_to_vmem [thread:$0]  %s3, 256, %s45, [#allocation7], 128, 128, 8
    $region17: #{simple_cnn_cancer_forward.1} parent=1 // pred_fallthru
      _
    // Predicated region
    $region18: #{simple_cnn_cancer_forward.1} parent=1 // pred_check
      _
    $region19: #{simple_cnn_cancer_forward.1} parent=1 // pred_check_branch
      %52 = sbr.rel (0) target = $region21
    $region20: #{simple_cnn_cancer_forward.1} parent=1 // pred_region
      _
    $region21: #{simple_cnn_cancer_forward.1} parent=1 // pred_fallthru
      _
    // Predicated region
    $region22: #{simple_cnn_cancer_forward.1} parent=1 // pred_check
      _
    $region23: #{simple_cnn_cancer_forward.1} parent=1 // pred_check_branch
      %54 = sbr.rel (0) target = $region25
    $region24: #{simple_cnn_cancer_forward.1} parent=1 // pred_region
      %55 = dma.done [#allocation4], 1536
    $region25: #{simple_cnn_cancer_forward.1} parent=1 // pred_fallthru
      _
    // Predicated region
    $region26: #{simple_cnn_cancer_forward.1} parent=1 // pred_check
      _
    $region27: #{simple_cnn_cancer_forward.1} parent=1 // pred_check_branch
      %57 = sbr.rel (0) target = $region29
    $region28: #{simple_cnn_cancer_forward.1} parent=1 // pred_region
      %58 = dma.done [#allocation7], 2304
    $region29: #{simple_cnn_cancer_forward.1} parent=1 // pred_fallthru
      _
    // Predicated region
    $region30: #{simple_cnn_cancer_forward.1} parent=1 // pred_check
      _
    $region31: #{simple_cnn_cancer_forward.1} parent=1 // pred_check_branch
      %60 = sbr.rel (0) target = $region33
    $region32: #{simple_cnn_cancer_forward.1} parent=1 // pred_region
      %61 = dma.done [#allocation7], 256
    $region33: #{simple_cnn_cancer_forward.1} parent=1 // pred_fallthru
      _
    %vm62 = vcmask 385024
    %63 = vst.msk [vmem:[#allocation2] sm:$0x1] %vm62, 0.0
    %vm64 = vcmask 1041152
    %65 = vst.msk [vmem:[#allocation2 + $0x17] sm:$0x1] %vm64, 0.0
    %vm66 = vcmask 122880
    %67 = vst.msk [vmem:[#allocation2 + $0x1f] sm:$0x1] %vm66, 0.0
    %68 = vst.msk [vmem:[#allocation2 + $0x20] sm:$0x1] %vm62, 0.0
    %69 = vst.msk [vmem:[#allocation2 + $0x37] sm:$0x1] %vm64, 0.0
    %70 = vst.msk [vmem:[#allocation2 + $0x3f] sm:$0x1] %vm66, 0.0
    %v71 = vld [vmem:[#allocation3] sm:$0xff]
    %v72 = vld [vmem:[#allocation3 + $0x8] sm:$0x7f]
    %vm75 = vcmask 1040384
    %v76 = vrot.slane %v71, 7
    %v77 = vrot.slane %v72, 7
    %v78 = vsel %vm75, %v76, %v77
    %vm81 = vcmask 130049
    %82 = vst.msk [vmem:[#allocation2] sm:$0xfe] %vm81, %v76
    %vm83 = vcmask 130048
    %84 = vst.msk [vmem:[#allocation2 + $0x10] sm:$0xff] %vm83, %v78
    %s85 = scalar_lea.vmem [#allocation3], 48
    %v86 = vld [vmem:[%s85] sm:$0xff]
    %v87 = vld [vmem:[%s85 + $0x8] sm:$0x7f]
    %v90 = vrot.slane %v86, 7
    %v91 = vrot.slane %v87, 7
    %v92 = vsel %vm75, %v90, %v91
    %95 = vst.msk [vmem:[#allocation2 + $0x20] sm:$0xfe] %vm81, %v90
    %96 = vst.msk [vmem:[#allocation2 + $0x30] sm:$0xff] %vm83, %v92
    %s97 = scalar_lea.vmem [#allocation3], 16
    %v98 = vld [vmem:[%s97] sm:$0xff]
    %v99 = vld [vmem:[%s97 + $0x8] sm:$0x7f]
    %v102 = vrot.slane %v98, 7
    %v103 = vrot.slane %v99, 7
    %v104 = vsel %vm75, %v102, %v103
    %105 = vrot.lane.b32.xlu0 %v102, 16
    %v106 = vpop.permute.xlu0 %105
    %107 = vrot.lane.b32.xlu0 %v104, 16
    %v108 = vpop.permute.xlu0 %107
    %vm111 = vcmask 261249
    %112 = vst.msk [vmem:[#allocation2] sm:$0xfe] %vm111, %v106
    %vm113 = vcmask 261248
    %114 = vst.msk [vmem:[#allocation2 + $0x10] sm:$0xff] %vm113, %v108
    %s115 = scalar_lea.vmem [#allocation3], 64
    %v116 = vld [vmem:[%s115] sm:$0xff]
    %v117 = vld [vmem:[%s115 + $0x8] sm:$0x7f]
    %v120 = vrot.slane %v116, 7
    %v121 = vrot.slane %v117, 7
    %v122 = vsel %vm75, %v120, %v121
    %123 = vrot.lane.b32.xlu0 %v120, 16
    %v124 = vpop.permute.xlu0 %123
    %125 = vrot.lane.b32.xlu0 %v122, 16
    %v126 = vpop.permute.xlu0 %125
    %129 = vst.msk [vmem:[#allocation2 + $0x20] sm:$0xfe] %vm111, %v124
    %130 = vst.msk [vmem:[#allocation2 + $0x30] sm:$0xff] %vm113, %v126
    %s131 = scalar_lea.vmem [#allocation3], 32
    %v132 = vld [vmem:[%s131] sm:$0xff]
    %v133 = vld [vmem:[%s131 + $0x8] sm:$0x7f]
    %v136 = vrot.slane %v132, 7
    %v137 = vrot.slane %v133, 7
    %v138 = vsel %vm75, %v136, %v137
    %139 = vrot.lane.b32.xlu0 %v136, 32
    %v140 = vpop.permute.xlu0 %139
    %141 = vrot.lane.b32.xlu0 %v138, 32
    %v142 = vpop.permute.xlu0 %141
    %vm145 = vcmask 392449
    %146 = vst.msk [vmem:[#allocation2] sm:$0xfe] %vm145, %v140
    %vm147 = vcmask 392448
    %148 = vst.msk [vmem:[#allocation2 + $0x10] sm:$0xff] %vm147, %v142
    %s149 = scalar_lea.vmem [#allocation3], 80
    %v150 = vld [vmem:[%s149] sm:$0xff]
    %v151 = vld [vmem:[%s149 + $0x8] sm:$0x7f]
    %v154 = vrot.slane %v150, 7
    %v155 = vrot.slane %v151, 7
    %v156 = vsel %vm75, %v154, %v155
    %157 = vrot.lane.b32.xlu0 %v154, 32
    %v158 = vpop.permute.xlu0 %157
    %159 = vrot.lane.b32.xlu0 %v156, 32
    %v160 = vpop.permute.xlu0 %159
    %163 = vst.msk [vmem:[#allocation2 + $0x20] sm:$0xfe] %vm145, %v158
    %164 = vst.msk [vmem:[#allocation2 + $0x30] sm:$0xff] %vm147, %v160
    %v165 = vld [vmem:[#allocation3] sm:$0xff]
    %v166 = vld [vmem:[#allocation3 + $0x8] sm:$0xff]
    %169 = vrot.lane.b32.xlu0 %v165, 48
    %v170 = vpop.permute.xlu0 %169
    %171 = vrot.lane.b32.xlu0 %v166, 48
    %v172 = vpop.permute.xlu0 %171
    %vm175 = vcmask 523648
    %176 = vst.msk [vmem:[#allocation2] sm:$0xff] %vm175, %v170
    %177 = vst.msk [vmem:[#allocation2 + $0x10] sm:$0xff] %vm175, %v172
    %v178 = vld [vmem:[%s85] sm:$0xff]
    %v179 = vld [vmem:[%s85 + $0x8] sm:$0xff]
    %182 = vrot.lane.b32.xlu0 %v178, 48
    %v183 = vpop.permute.xlu0 %182
    %184 = vrot.lane.b32.xlu0 %v179, 48
    %v185 = vpop.permute.xlu0 %184
    %188 = vst.msk [vmem:[#allocation2 + $0x20] sm:$0xff] %vm175, %v183
    %189 = vst.msk [vmem:[#allocation2 + $0x30] sm:$0xff] %vm175, %v185
    %v190 = vld [vmem:[%s97] sm:$0xff]
    %v191 = vld [vmem:[%s97 + $0x8] sm:$0xff]
    %194 = vrot.lane.b32.xlu0 %v190, 64
    %v195 = vpop.permute.xlu0 %194
    %196 = vrot.lane.b32.xlu0 %v191, 64
    %v197 = vpop.permute.xlu0 %196
    %vm200 = vcmask 654848
    %201 = vst.msk [vmem:[#allocation2] sm:$0xff] %vm200, %v195
    %202 = vst.msk [vmem:[#allocation2 + $0x10] sm:$0xff] %vm200, %v197
    %v203 = vld [vmem:[%s115] sm:$0xff]
    %v204 = vld [vmem:[%s115 + $0x8] sm:$0xff]
    %207 = vrot.lane.b32.xlu0 %v203, 64
    %v208 = vpop.permute.xlu0 %207
    %209 = vrot.lane.b32.xlu0 %v204, 64
    %v210 = vpop.permute.xlu0 %209
    %213 = vst.msk [vmem:[#allocation2 + $0x20] sm:$0xff] %vm200, %v208
    %214 = vst.msk [vmem:[#allocation2 + $0x30] sm:$0xff] %vm200, %v210
    %v215 = vld [vmem:[%s131] sm:$0xff]
    %v216 = vld [vmem:[%s131 + $0x8] sm:$0xff]
    %219 = vrot.lane.b32.xlu0 %v215, 80
    %v220 = vpop.permute.xlu0 %219
    %221 = vrot.lane.b32.xlu0 %v216, 80
    %v222 = vpop.permute.xlu0 %221
    %vm225 = vcmask 786048
    %226 = vst.msk [vmem:[#allocation2] sm:$0xff] %vm225, %v220
    %227 = vst.msk [vmem:[#allocation2 + $0x10] sm:$0xff] %vm225, %v222
    %v228 = vld [vmem:[%s149] sm:$0xff]
    %v229 = vld [vmem:[%s149 + $0x8] sm:$0xff]
    %232 = vrot.lane.b32.xlu0 %v228, 80
    %v233 = vpop.permute.xlu0 %232
    %234 = vrot.lane.b32.xlu0 %v229, 80
    %v235 = vpop.permute.xlu0 %234
    %238 = vst.msk [vmem:[#allocation2 + $0x20] sm:$0xff] %vm225, %v233
    %239 = vst.msk [vmem:[#allocation2 + $0x30] sm:$0xff] %vm225, %v235
    %v240 = vld [vmem:[#allocation3 + $0x1] sm:$0xff]
    %v241 = vld [vmem:[#allocation3 + $0x9] sm:$0x7f]
    %244 = vrot.lane.b32.xlu0 %v240, 96
    %v245 = vpop.permute.xlu0 %244
    %246 = vrot.lane.b32.xlu0 %v241, 96
    %v247 = vpop.permute.xlu0 %246
    %vm250 = vcmask 917248
    %251 = vst.msk [vmem:[#allocation2] sm:$0xff] %vm250, %v245
    %vm252 = vcmask 916224
    %253 = vst.msk [vmem:[#allocation2 + $0x10] sm:$0x7f] %vm252, %v247
    %v254 = vld [vmem:[%s85 + $0x1] sm:$0xff]
    %v255 = vld [vmem:[%s85 + $0x9] sm:$0x7f]
    %258 = vrot.lane.b32.xlu0 %v254, 96
    %v259 = vpop.permute.xlu0 %258
    %260 = vrot.lane.b32.xlu0 %v255, 96
    %v261 = vpop.permute.xlu0 %260
    %264 = vst.msk [vmem:[#allocation2 + $0x20] sm:$0xff] %vm250, %v259
    %265 = vst.msk [vmem:[#allocation2 + $0x30] sm:$0x7f] %vm252, %v261
    %v266 = vld [vmem:[%s97 + $0x1] sm:$0xff]
    %v267 = vld [vmem:[%s97 + $0x9] sm:$0x7f]
    %270 = vrot.lane.b32.xlu0 %v266, 112
    %v271 = vpop.permute.xlu0 %270
    %272 = vrot.lane.b32.xlu0 %v267, 112
    %v273 = vpop.permute.xlu0 %272
    %vm276 = vcmask 1048448
    %277 = vst.msk [vmem:[#allocation2] sm:$0xff] %vm276, %v271
    %vm278 = vcmask 1047424
    %279 = vst.msk [vmem:[#allocation2 + $0x10] sm:$0x7f] %vm278, %v273
    %v280 = vld [vmem:[%s115 + $0x1] sm:$0xff]
    %v281 = vld [vmem:[%s115 + $0x9] sm:$0x7f]
    %284 = vrot.lane.b32.xlu0 %v280, 112
    %v285 = vpop.permute.xlu0 %284
    %286 = vrot.lane.b32.xlu0 %v281, 112
    %v287 = vpop.permute.xlu0 %286
    %290 = vst.msk [vmem:[#allocation2 + $0x20] sm:$0xff] %vm276, %v285
    %291 = vst.msk [vmem:[#allocation2 + $0x30] sm:$0x7f] %vm278, %v287
    %v292 = vld [vmem:[%s131 + $0x1] sm:$0xff]
    %v293 = vld [vmem:[%s131 + $0x9] sm:$0x7f]
    %294 = vst.msk [vmem:[#allocation2 + $0x8] sm:$0xff] %vm83, %v292
    %vm295 = vcmask 129024
    %296 = vst.msk [vmem:[#allocation2 + $0x18] sm:$0x7f] %vm295, %v293
    %v297 = vld [vmem:[%s149 + $0x1] sm:$0xff]
    %v298 = vld [vmem:[%s149 + $0x9] sm:$0x7f]
    %299 = vst.msk [vmem:[#allocation2 + $0x28] sm:$0xff] %vm83, %v297
    %300 = vst.msk [vmem:[#allocation2 + $0x38] sm:$0x7f] %vm295, %v298
    %v301 = vld [vmem:[#allocation6] sm:$0xff]
    %v302 = vld [vmem:[#allocation6 + $0x8] sm:$0xff]
    %v303 = vld [vmem:[#allocation6 + $0x10] sm:$0xff]
    %v304 = vld [vmem:[#allocation6 + $0x18] sm:$0xff]
    %v305 = vld [vmem:[#allocation6 + $0x20] sm:$0xff]
    %v306 = vld [vmem:[#allocation6 + $0x28] sm:$0xff]
    %v307 = vld [vmem:[#allocation6 + $0x30] sm:$0xff]
    %v308 = vld [vmem:[#allocation6 + $0x38] sm:$0xff]
    %v309 = vld [vmem:[#allocation6 + $0x40] sm:$0xff]
    %v310 = vld [vmem:[#allocation6 + $0x48] sm:$0xff]
    %v311 = vld [vmem:[#allocation6 + $0x50] sm:$0xff]
    %v312 = vld [vmem:[#allocation6 + $0x58] sm:$0xff]
    %v313 = vld [vmem:[#allocation6 + $0x60] sm:$0xff]
    %v314 = vld [vmem:[#allocation6 + $0x68] sm:$0xff]
    %v315 = vld [vmem:[#allocation6 + $0x70] sm:$0xff]
    %v316 = vld [vmem:[#allocation6 + $0x78] sm:$0xff]
    %v317 = vld [vmem:[#allocation6 + $0x80] sm:$0xff]
    %v318 = vld [vmem:[#allocation6 + $0x88] sm:$0xff]
    %v319 = vunpack.c.l.bf16 %v301
    %v320 = vunpack.c.h.bf16 %v301
    %v321 = vunpack.c.l.bf16 %v302
    %v322 = vunpack.c.h.bf16 %v302
    %v323 = vunpack.c.l.bf16 %v303
    %v324 = vunpack.c.h.bf16 %v303
    %v325 = vunpack.c.l.bf16 %v304
    %v326 = vunpack.c.h.bf16 %v304
    %v327 = vunpack.c.l.bf16 %v305
    %v328 = vunpack.c.h.bf16 %v305
    %v329 = vunpack.c.l.bf16 %v306
    %v330 = vunpack.c.h.bf16 %v306
    %v331 = vunpack.c.l.bf16 %v307
    %v332 = vunpack.c.h.bf16 %v307
    %v333 = vunpack.c.l.bf16 %v308
    %v334 = vunpack.c.h.bf16 %v308
    %v335 = vunpack.c.l.bf16 %v309
    %v336 = vunpack.c.h.bf16 %v309
    %v337 = vunpack.c.l.bf16 %v310
    %v338 = vunpack.c.h.bf16 %v310
    %v339 = vunpack.c.l.bf16 %v311
    %v340 = vunpack.c.h.bf16 %v311
    %v341 = vunpack.c.l.bf16 %v312
    %v342 = vunpack.c.h.bf16 %v312
    %v343 = vunpack.c.l.bf16 %v313
    %v344 = vunpack.c.h.bf16 %v313
    %v345 = vunpack.c.l.bf16 %v314
    %v346 = vunpack.c.h.bf16 %v314
    %v347 = vunpack.c.l.bf16 %v315
    %v348 = vunpack.c.h.bf16 %v315
    %v349 = vunpack.c.l.bf16 %v316
    %v350 = vunpack.c.h.bf16 %v316
    %v351 = vunpack.c.l.bf16 %v317
    %v352 = vunpack.c.h.bf16 %v317
    %v353 = vunpack.c.l.bf16 %v318
    %v354 = vunpack.c.h.bf16 %v318
    %v355 = vld [vmem:[#allocation2] sm:$0xff]
    %v356 = vld [vmem:[#allocation2 + $0x8] sm:$0xff]
    %v357 = vld [vmem:[#allocation2 + $0x10] sm:$0xff]
    %v358 = vld [vmem:[#allocation2 + $0x18] sm:$0xff]
    %v359 = vld [vmem:[#allocation2 + $0x20] sm:$0xff]
    %v360 = vld [vmem:[#allocation2 + $0x28] sm:$0xff]
    %v361 = vld [vmem:[#allocation2 + $0x30] sm:$0xff]
    %v362 = vld [vmem:[#allocation2 + $0x38] sm:$0xff]
    %v363 = vld [vmem:[%s2] sm:$0x3]
    %v365 = vlaneseq
    %v366 = vshrl.u32 %v365, 7
    %v367 = vsub.s32 0, %v366
    %v368 = vrot.slane %v363, %v367
    %v369 = vlaneseq
    %v370 = vshrl.u32 %v369, 7
    %v371 = vsub.s32 1, %v370
    %v372 = vrot.slane %v363, %v371
    %v376 = vsel %vm83, %v356, 0
    %v379 = vsel %vm83, %v358, 0
    %v382 = vsel %vm83, %v360, 0
    %v385 = vsel %vm83, %v362, 0
    %387 = vmatprep.subr.mxu0 %v320
    %388 = vmatpush1.msra.mxu0 %v319
    %389 = vmatprep.subr.mxu0 %v322
    %390 = vmatpush1.msra.mxu0 %v321
    %391 = vmatprep.subr.mxu0 %v324
    %392 = vmatpush1.msra.mxu0 %v323
    %393 = vmatprep.subr.mxu0 %v326
    %394 = vmatpush1.msra.mxu0 %v325
    %395 = vmatprep.subr.mxu0 %v328
    %396 = vmatpush1.msra.mxu0 %v327
    %397 = vmatprep.subr.mxu0 %v330
    %398 = vmatpush1.msra.mxu0 %v329
    %399 = vmatprep.subr.mxu0 %v332
    %400 = vmatpush1.msra.mxu0 %v331
    %401 = vmatprep.subr.mxu0 %v334
    %402 = vmatpush1.msra.mxu0 %v333
    %403 = vmatprep.subr.mxu0 %v336
    %404 = vmatpush1.msra.mxu0 %v335
    %405 = vmatprep.subr.mxu0 %v338
    %406 = vmatpush1.msra.mxu0 %v337
    %407 = vmatprep.subr.mxu0 %v340
    %408 = vmatpush1.msra.mxu0 %v339
    %409 = vmatprep.subr.mxu0 %v342
    %410 = vmatpush1.msra.mxu0 %v341
    %411 = vmatprep.subr.mxu0 %v344
    %412 = vmatpush1.msra.mxu0 %v343
    %413 = vmatprep.subr.mxu0 %v346
    %414 = vmatpush1.msra.mxu0 %v345
    %415 = vmatprep.subr.mxu0 %v348
    %416 = vmatpush1.msra.mxu0 %v347
    %417 = vmatprep.subr.mxu0 %v350
    %418 = vmatpush1.msra.mxu0 %v349
    %419 = vmatprep.subr.mxu0 %v352
    %420 = vmatpush1.msra.mxu0 %v351
    %421 = vmatprep.subr.mxu0 %v354
    %422 = vmatpush1.msra.mxu0 %v353
    %423 = vmatprep.subr.mxu0 0.0
    %424 = vmatpush1.msra.mxu0 0.0
    %425 = vmatprep.subr.mxu0 0.0
    %426 = vmatpush1.msra.mxu0 0.0
    %427 = vmatprep.subr.mxu0 0.0
    %428 = vmatpush1.msra.mxu0 0.0
    %429 = vmatprep.subr.mxu0 0.0
    %430 = vmatpush1.msra.mxu0 0.0
    %431 = vmatprep.subr.mxu0 0.0
    %432 = vmatpush1.msra.mxu0 0.0
    %433 = vmatprep.subr.mxu0 0.0
    %434 = vmatpush1.msra.mxu0 0.0
    %435 = vmatprep.subr.mxu0 0.0
    %436 = vmatpush1.msra.mxu0 0.0
    %437 = vmatprep.subr.mxu0 0.0
    %438 = vmatpush1.msra.mxu0 0.0
    %439 = vmatprep.subr.mxu0 0.0
    %440 = vmatpush1.msra.mxu0 0.0
    %441 = vmatprep.subr.mxu0 0.0
    %442 = vmatpush1.msra.mxu0 0.0
    %443 = vmatprep.subr.mxu0 0.0
    %444 = vmatpush1.msra.mxu0 0.0
    %445 = vmatprep.subr.mxu0 0.0
    %446 = vmatpush1.msra.mxu0 0.0
    %447 = vmatprep.subr.mxu0 0.0
    %448 = vmatpush1.msra.mxu0 0.0
    %449 = vmatprep.subr.mxu0 0.0
    %450 = vmatpush1.msra.mxu0 0.0
    %451 = vmatprep.mubr.f32.mxu0 %v376
    %452 = vmatmul.mubr.f32.gmra.mrb[0].mxu0 %v355
    %v453 = vpop.f32.mrb[0].mxu0
    %v454 = vadd.f32 %v368, %v453
    %v455 = vpop.f32.mrb[0].mxu0
    %v456 = vadd.f32 %v372, %v455
    %457 = vmatprep.mubr.f32.mxu0 %v379
    %458 = vmatmul.mubr.f32.gmra.mrb[0].mxu0 %v357
    %v459 = vpop.f32.mrb[0].mxu0
    %v460 = vadd.f32 %v368, %v459
    %v461 = vpop.f32.mrb[0].mxu0
    %v462 = vadd.f32 %v372, %v461
    %463 = vmatprep.mubr.f32.mxu0 %v382
    %464 = vmatmul.mubr.f32.gmra.mrb[0].mxu0 %v359
    %v465 = vpop.f32.mrb[0].mxu0
    %v466 = vadd.f32 %v368, %v465
    %v467 = vpop.f32.mrb[0].mxu0
    %v468 = vadd.f32 %v372, %v467
    %469 = vmatprep.mubr.f32.mxu0 %v385
    %470 = vmatmul.mubr.f32.gmra.mrb[0].mxu0 %v361
    %v471 = vpop.f32.mrb[0].mxu0
    %v472 = vadd.f32 %v368, %v471
    %v473 = vpop.f32.mrb[0].mxu0
    %v474 = vadd.f32 %v372, %v473
    %475 = vdwg.mxu0
    %v476 = vmax.f32 %v454, 0.0
    %v477 = vmax.f32 %v456, 0.0
    %v478 = vmax.f32 %v460, 0.0
    %v479 = vmax.f32 %v462, 0.0
    %v480 = vmax.f32 %v466, 0.0
    %v481 = vmax.f32 %v468, 0.0
    %v482 = vmax.f32 %v472, 0.0
    %v483 = vmax.f32 %v474, 0.0
    %v492 = vcombine.low %v476, %v477
    %v493 = vcombine.high %v476, %v477
    %v495 = vunpack.c.l.s4 1983009808
    %v496 = vunpack.c.0.s8 %v495
    %v497 = vlaneseq
    %v498 = vshrl.u32 %v497, 7
    %v499 = vsub.s32 %v496, %v498
    %v500 = vrot.slane %v492, %v499
    %v502 = vunpack.c.l.s4 1983009808
    %v503 = vunpack.c.0.s8 %v502
    %v504 = vlaneseq
    %v505 = vshrl.u32 %v504, 7
    %v506 = vsub.s32 %v503, %v505
    %v507 = vrot.slane %v493, %v506
    %v508 = vcombine.high %v500, %v500
    %v509 = vcombine.high %v507, %v507
    %v510 = vcombine.low %v478, %v479
    %v511 = vcombine.high %v478, %v479
    %v513 = vunpack.c.l.s4 1983009808
    %v514 = vunpack.c.0.s8 %v513
    %v515 = vlaneseq
    %v516 = vshrl.u32 %v515, 7
    %v517 = vsub.s32 %v514, %v516
    %v518 = vrot.slane %v510, %v517
    %v520 = vunpack.c.l.s4 1983009808
    %v521 = vunpack.c.0.s8 %v520
    %v522 = vlaneseq
    %v523 = vshrl.u32 %v522, 7
    %v524 = vsub.s32 %v521, %v523
    %v525 = vrot.slane %v511, %v524
    %v526 = vcombine.high %v518, %v518
    %v527 = vcombine.high %v525, %v525
    %v528 = vcombine.low %v480, %v481
    %v529 = vcombine.high %v480, %v481
    %v531 = vunpack.c.l.s4 1983009808
    %v532 = vunpack.c.0.s8 %v531
    %v533 = vlaneseq
    %v534 = vshrl.u32 %v533, 7
    %v535 = vsub.s32 %v532, %v534
    %v536 = vrot.slane %v528, %v535
    %v538 = vunpack.c.l.s4 1983009808
    %v539 = vunpack.c.0.s8 %v538
    %v540 = vlaneseq
    %v541 = vshrl.u32 %v540, 7
    %v542 = vsub.s32 %v539, %v541
    %v543 = vrot.slane %v529, %v542
    %v544 = vcombine.high %v536, %v536
    %v545 = vcombine.high %v543, %v543
    %v546 = vcombine.low %v482, %v483
    %v547 = vcombine.high %v482, %v483
    %v549 = vunpack.c.l.s4 1983009808
    %v550 = vunpack.c.0.s8 %v549
    %v551 = vlaneseq
    %v552 = vshrl.u32 %v551, 7
    %v553 = vsub.s32 %v550, %v552
    %v554 = vrot.slane %v546, %v553
    %v556 = vunpack.c.l.s4 1983009808
    %v557 = vunpack.c.0.s8 %v556
    %v558 = vlaneseq
    %v559 = vshrl.u32 %v558, 7
    %v560 = vsub.s32 %v557, %v559
    %v561 = vrot.slane %v547, %v560
    %v562 = vcombine.high %v554, %v554
    %v563 = vcombine.high %v561, %v561
    %v565 = vunpack.c.l.s4 1983009808
    %v566 = vunpack.c.0.s8 %v565
    %v567 = vlaneseq
    %v568 = vshrl.u32 %v567, 7
    %v569 = vsub.s32 %v566, %v568
    %v570 = vrot.slane %v500, %v569
    %v571 = vcombine.high %v570, %v570
    %v573 = vunpack.c.l.s4 1983009808
    %v574 = vunpack.c.0.s8 %v573
    %v575 = vlaneseq
    %v576 = vshrl.u32 %v575, 7
    %v577 = vsub.s32 %v574, %v576
    %v578 = vrot.slane %v508, %v577
    %v579 = vcombine.high %v578, %v578
    %v581 = vunpack.c.l.s4 1983009808
    %v582 = vunpack.c.0.s8 %v581
    %v583 = vlaneseq
    %v584 = vshrl.u32 %v583, 7
    %v585 = vsub.s32 %v582, %v584
    %v586 = vrot.slane %v507, %v585
    %v587 = vcombine.high %v586, %v586
    %v589 = vunpack.c.l.s4 1983009808
    %v590 = vunpack.c.0.s8 %v589
    %v591 = vlaneseq
    %v592 = vshrl.u32 %v591, 7
    %v593 = vsub.s32 %v590, %v592
    %v594 = vrot.slane %v509, %v593
    %v595 = vcombine.high %v594, %v594
    %v597 = vunpack.c.l.s4 1983009808
    %v598 = vunpack.c.0.s8 %v597
    %v599 = vlaneseq
    %v600 = vshrl.u32 %v599, 7
    %v601 = vsub.s32 %v598, %v600
    %v602 = vrot.slane %v518, %v601
    %v603 = vcombine.high %v602, %v602
    %v605 = vunpack.c.l.s4 1983009808
    %v606 = vunpack.c.0.s8 %v605
    %v607 = vlaneseq
    %v608 = vshrl.u32 %v607, 7
    %v609 = vsub.s32 %v606, %v608
    %v610 = vrot.slane %v526, %v609
    %v611 = vcombine.high %v610, %v610
    %v613 = vunpack.c.l.s4 1983009808
    %v614 = vunpack.c.0.s8 %v613
    %v615 = vlaneseq
    %v616 = vshrl.u32 %v615, 7
    %v617 = vsub.s32 %v614, %v616
    %v618 = vrot.slane %v525, %v617
    %v619 = vcombine.high %v618, %v618
    %v621 = vunpack.c.l.s4 1983009808
    %v622 = vunpack.c.0.s8 %v621
    %v623 = vlaneseq
    %v624 = vshrl.u32 %v623, 7
    %v625 = vsub.s32 %v622, %v624
    %v626 = vrot.slane %v527, %v625
    %v627 = vcombine.high %v626, %v626
    %v629 = vunpack.c.l.s4 1983009808
    %v630 = vunpack.c.0.s8 %v629
    %v631 = vlaneseq
    %v632 = vshrl.u32 %v631, 7
    %v633 = vsub.s32 %v630, %v632
    %v634 = vrot.slane %v536, %v633
    %v635 = vcombine.high %v634, %v634
    %v637 = vunpack.c.l.s4 1983009808
    %v638 = vunpack.c.0.s8 %v637
    %v639 = vlaneseq
    %v640 = vshrl.u32 %v639, 7
    %v641 = vsub.s32 %v638, %v640
    %v642 = vrot.slane %v544, %v641
    %v643 = vcombine.high %v642, %v642
    %v645 = vunpack.c.l.s4 1983009808
    %v646 = vunpack.c.0.s8 %v645
    %v647 = vlaneseq
    %v648 = vshrl.u32 %v647, 7
    %v649 = vsub.s32 %v646, %v648
    %v650 = vrot.slane %v543, %v649
    %v651 = vcombine.high %v650, %v650
    %v653 = vunpack.c.l.s4 1983009808
    %v654 = vunpack.c.0.s8 %v653
    %v655 = vlaneseq
    %v656 = vshrl.u32 %v655, 7
    %v657 = vsub.s32 %v654, %v656
    %v658 = vrot.slane %v545, %v657
    %v659 = vcombine.high %v658, %v658
    %v661 = vunpack.c.l.s4 1983009808
    %v662 = vunpack.c.0.s8 %v661
    %v663 = vlaneseq
    %v664 = vshrl.u32 %v663, 7
    %v665 = vsub.s32 %v662, %v664
    %v666 = vrot.slane %v554, %v665
    %v667 = vcombine.high %v666, %v666
    %v669 = vunpack.c.l.s4 1983009808
    %v670 = vunpack.c.0.s8 %v669
    %v671 = vlaneseq
    %v672 = vshrl.u32 %v671, 7
    %v673 = vsub.s32 %v670, %v672
    %v674 = vrot.slane %v562, %v673
    %v675 = vcombine.high %v674, %v674
    %v677 = vunpack.c.l.s4 1983009808
    %v678 = vunpack.c.0.s8 %v677
    %v679 = vlaneseq
    %v680 = vshrl.u32 %v679, 7
    %v681 = vsub.s32 %v678, %v680
    %v682 = vrot.slane %v561, %v681
    %v683 = vcombine.high %v682, %v682
    %v685 = vunpack.c.l.s4 1983009808
    %v686 = vunpack.c.0.s8 %v685
    %v687 = vlaneseq
    %v688 = vshrl.u32 %v687, 7
    %v689 = vsub.s32 %v686, %v688
    %v690 = vrot.slane %v563, %v689
    %v691 = vcombine.high %v690, %v690
    %vm724 = vcmask 1041408
    %v725 = vsel %vm724, %v570, -inf
    %v726 = vrot.slane %v725, 4
    %v727 = vmax.f32 %v725, %v726
    %v728 = vrot.slane %v727, 2
    %v729 = vmax.f32 %v727, %v728
    %v730 = vrot.slane %v729, 1
    %v731 = vmax.f32 %v729, %v730
    %v732 = vsel %vm724, %v571, -inf
    %v733 = vrot.slane %v732, 4
    %v734 = vmax.f32 %v732, %v733
    %v735 = vrot.slane %v734, 2
    %v736 = vmax.f32 %v734, %v735
    %v737 = vrot.slane %v736, 1
    %v738 = vmax.f32 %v736, %v737
    %v739 = vsel %vm724, %v578, -inf
    %v740 = vrot.slane %v739, 4
    %v741 = vmax.f32 %v739, %v740
    %v742 = vrot.slane %v741, 2
    %v743 = vmax.f32 %v741, %v742
    %v744 = vrot.slane %v743, 1
    %v745 = vmax.f32 %v743, %v744
    %v746 = vsel %vm724, %v579, -inf
    %v747 = vrot.slane %v746, 4
    %v748 = vmax.f32 %v746, %v747
    %v749 = vrot.slane %v748, 2
    %v750 = vmax.f32 %v748, %v749
    %v751 = vrot.slane %v750, 1
    %v752 = vmax.f32 %v750, %v751
    %v753 = vsel %vm724, %v586, -inf
    %v754 = vrot.slane %v753, 4
    %v755 = vmax.f32 %v753, %v754
    %v756 = vrot.slane %v755, 2
    %v757 = vmax.f32 %v755, %v756
    %v758 = vrot.slane %v757, 1
    %v759 = vmax.f32 %v757, %v758
    %v760 = vsel %vm724, %v587, -inf
    %v761 = vrot.slane %v760, 4
    %v762 = vmax.f32 %v760, %v761
    %v763 = vrot.slane %v762, 2
    %v764 = vmax.f32 %v762, %v763
    %v765 = vrot.slane %v764, 1
    %v766 = vmax.f32 %v764, %v765
    %v767 = vsel %vm724, %v594, -inf
    %v768 = vrot.slane %v767, 4
    %v769 = vmax.f32 %v767, %v768
    %v770 = vrot.slane %v769, 2
    %v771 = vmax.f32 %v769, %v770
    %v772 = vrot.slane %v771, 1
    %v773 = vmax.f32 %v771, %v772
    %v774 = vsel %vm724, %v595, -inf
    %v775 = vrot.slane %v774, 4
    %v776 = vmax.f32 %v774, %v775
    %v777 = vrot.slane %v776, 2
    %v778 = vmax.f32 %v776, %v777
    %v779 = vrot.slane %v778, 1
    %v780 = vmax.f32 %v778, %v779
    %v781 = vsel %vm724, %v602, -inf
    %v782 = vrot.slane %v781, 4
    %v783 = vmax.f32 %v781, %v782
    %v784 = vrot.slane %v783, 2
    %v785 = vmax.f32 %v783, %v784
    %v786 = vrot.slane %v785, 1
    %v787 = vmax.f32 %v785, %v786
    %v788 = vsel %vm724, %v603, -inf
    %v789 = vrot.slane %v788, 4
    %v790 = vmax.f32 %v788, %v789
    %v791 = vrot.slane %v790, 2
    %v792 = vmax.f32 %v790, %v791
    %v793 = vrot.slane %v792, 1
    %v794 = vmax.f32 %v792, %v793
    %v795 = vsel %vm724, %v610, -inf
    %v796 = vrot.slane %v795, 4
    %v797 = vmax.f32 %v795, %v796
    %v798 = vrot.slane %v797, 2
    %v799 = vmax.f32 %v797, %v798
    %v800 = vrot.slane %v799, 1
    %v801 = vmax.f32 %v799, %v800
    %v802 = vsel %vm724, %v611, -inf
    %v803 = vrot.slane %v802, 4
    %v804 = vmax.f32 %v802, %v803
    %v805 = vrot.slane %v804, 2
    %v806 = vmax.f32 %v804, %v805
    %v807 = vrot.slane %v806, 1
    %v808 = vmax.f32 %v806, %v807
    %v809 = vsel %vm724, %v618, -inf
    %v810 = vrot.slane %v809, 4
    %v811 = vmax.f32 %v809, %v810
    %v812 = vrot.slane %v811, 2
    %v813 = vmax.f32 %v811, %v812
    %v814 = vrot.slane %v813, 1
    %v815 = vmax.f32 %v813, %v814
    %v816 = vsel %vm724, %v619, -inf
    %v817 = vrot.slane %v816, 4
    %v818 = vmax.f32 %v816, %v817
    %v819 = vrot.slane %v818, 2
    %v820 = vmax.f32 %v818, %v819
    %v821 = vrot.slane %v820, 1
    %v822 = vmax.f32 %v820, %v821
    %v823 = vsel %vm724, %v626, -inf
    %v824 = vrot.slane %v823, 4
    %v825 = vmax.f32 %v823, %v824
    %v826 = vrot.slane %v825, 2
    %v827 = vmax.f32 %v825, %v826
    %v828 = vrot.slane %v827, 1
    %v829 = vmax.f32 %v827, %v828
    %v830 = vsel %vm724, %v627, -inf
    %v831 = vrot.slane %v830, 4
    %v832 = vmax.f32 %v830, %v831
    %v833 = vrot.slane %v832, 2
    %v834 = vmax.f32 %v832, %v833
    %v835 = vrot.slane %v834, 1
    %v836 = vmax.f32 %v834, %v835
    %v837 = vsel %vm724, %v634, -inf
    %v838 = vrot.slane %v837, 4
    %v839 = vmax.f32 %v837, %v838
    %v840 = vrot.slane %v839, 2
    %v841 = vmax.f32 %v839, %v840
    %v842 = vrot.slane %v841, 1
    %v843 = vmax.f32 %v841, %v842
    %v844 = vsel %vm724, %v635, -inf
    %v845 = vrot.slane %v844, 4
    %v846 = vmax.f32 %v844, %v845
    %v847 = vrot.slane %v846, 2
    %v848 = vmax.f32 %v846, %v847
    %v849 = vrot.slane %v848, 1
    %v850 = vmax.f32 %v848, %v849
    %v851 = vsel %vm724, %v642, -inf
    %v852 = vrot.slane %v851, 4
    %v853 = vmax.f32 %v851, %v852
    %v854 = vrot.slane %v853, 2
    %v855 = vmax.f32 %v853, %v854
    %v856 = vrot.slane %v855, 1
    %v857 = vmax.f32 %v855, %v856
    %v858 = vsel %vm724, %v643, -inf
    %v859 = vrot.slane %v858, 4
    %v860 = vmax.f32 %v858, %v859
    %v861 = vrot.slane %v860, 2
    %v862 = vmax.f32 %v860, %v861
    %v863 = vrot.slane %v862, 1
    %v864 = vmax.f32 %v862, %v863
    %v865 = vsel %vm724, %v650, -inf
    %v866 = vrot.slane %v865, 4
    %v867 = vmax.f32 %v865, %v866
    %v868 = vrot.slane %v867, 2
    %v869 = vmax.f32 %v867, %v868
    %v870 = vrot.slane %v869, 1
    %v871 = vmax.f32 %v869, %v870
    %v872 = vsel %vm724, %v651, -inf
    %v873 = vrot.slane %v872, 4
    %v874 = vmax.f32 %v872, %v873
    %v875 = vrot.slane %v874, 2
    %v876 = vmax.f32 %v874, %v875
    %v877 = vrot.slane %v876, 1
    %v878 = vmax.f32 %v876, %v877
    %v879 = vsel %vm724, %v658, -inf
    %v880 = vrot.slane %v879, 4
    %v881 = vmax.f32 %v879, %v880
    %v882 = vrot.slane %v881, 2
    %v883 = vmax.f32 %v881, %v882
    %v884 = vrot.slane %v883, 1
    %v885 = vmax.f32 %v883, %v884
    %v886 = vsel %vm724, %v659, -inf
    %v887 = vrot.slane %v886, 4
    %v888 = vmax.f32 %v886, %v887
    %v889 = vrot.slane %v888, 2
    %v890 = vmax.f32 %v888, %v889
    %v891 = vrot.slane %v890, 1
    %v892 = vmax.f32 %v890, %v891
    %v893 = vsel %vm724, %v666, -inf
    %v894 = vrot.slane %v893, 4
    %v895 = vmax.f32 %v893, %v894
    %v896 = vrot.slane %v895, 2
    %v897 = vmax.f32 %v895, %v896
    %v898 = vrot.slane %v897, 1
    %v899 = vmax.f32 %v897, %v898
    %v900 = vsel %vm724, %v667, -inf
    %v901 = vrot.slane %v900, 4
    %v902 = vmax.f32 %v900, %v901
    %v903 = vrot.slane %v902, 2
    %v904 = vmax.f32 %v902, %v903
    %v905 = vrot.slane %v904, 1
    %v906 = vmax.f32 %v904, %v905
    %v907 = vsel %vm724, %v674, -inf
    %v908 = vrot.slane %v907, 4
    %v909 = vmax.f32 %v907, %v908
    %v910 = vrot.slane %v909, 2
    %v911 = vmax.f32 %v909, %v910
    %v912 = vrot.slane %v911, 1
    %v913 = vmax.f32 %v911, %v912
    %v914 = vsel %vm724, %v675, -inf
    %v915 = vrot.slane %v914, 4
    %v916 = vmax.f32 %v914, %v915
    %v917 = vrot.slane %v916, 2
    %v918 = vmax.f32 %v916, %v917
    %v919 = vrot.slane %v918, 1
    %v920 = vmax.f32 %v918, %v919
    %v921 = vsel %vm724, %v682, -inf
    %v922 = vrot.slane %v921, 4
    %v923 = vmax.f32 %v921, %v922
    %v924 = vrot.slane %v923, 2
    %v925 = vmax.f32 %v923, %v924
    %v926 = vrot.slane %v925, 1
    %v927 = vmax.f32 %v925, %v926
    %v928 = vsel %vm724, %v683, -inf
    %v929 = vrot.slane %v928, 4
    %v930 = vmax.f32 %v928, %v929
    %v931 = vrot.slane %v930, 2
    %v932 = vmax.f32 %v930, %v931
    %v933 = vrot.slane %v932, 1
    %v934 = vmax.f32 %v932, %v933
    %v935 = vsel %vm724, %v690, -inf
    %v936 = vrot.slane %v935, 4
    %v937 = vmax.f32 %v935, %v936
    %v938 = vrot.slane %v937, 2
    %v939 = vmax.f32 %v937, %v938
    %v940 = vrot.slane %v939, 1
    %v941 = vmax.f32 %v939, %v940
    %v942 = vsel %vm724, %v691, -inf
    %v943 = vrot.slane %v942, 4
    %v944 = vmax.f32 %v942, %v943
    %v945 = vrot.slane %v944, 2
    %v946 = vmax.f32 %v944, %v945
    %v947 = vrot.slane %v946, 1
    %v948 = vmax.f32 %v946, %v947
    %v949 = vmax.f32 %v731, %v738
    %v950 = vmax.f32 %v745, %v752
    %v951 = vmax.f32 %v759, %v766
    %v952 = vmax.f32 %v773, %v780
    %v953 = vmax.f32 %v787, %v794
    %v954 = vmax.f32 %v801, %v808
    %v955 = vmax.f32 %v815, %v822
    %v956 = vmax.f32 %v829, %v836
    %v957 = vmax.f32 %v843, %v850
    %v958 = vmax.f32 %v857, %v864
    %v959 = vmax.f32 %v871, %v878
    %v960 = vmax.f32 %v885, %v892
    %v961 = vmax.f32 %v899, %v906
    %v962 = vmax.f32 %v913, %v920
    %v963 = vmax.f32 %v927, %v934
    %v964 = vmax.f32 %v941, %v948
    %v965 = vld [vmem:[#allocation8] sm:$0x3]
    %v966 = vld [vmem:[#allocation8 + $0x2] sm:$0x3]
    %vm969 = vcmask 1041409
    %v970 = vsel %vm969, %v958, %v950
    %972 = vmatprep.subr.mxu0 0.0
    %973 = vmatpush1.xpose.msra.mxu0 %v966
    %974 = vmatprep.subr.mxu0 0.0
    %975 = vmatpush1.xpose.msra.mxu0 0.0
    %976 = vmatprep.subr.mxu0 0.0
    %977 = vmatpush1.xpose.msra.mxu0 0.0
    %978 = vmatprep.subr.mxu0 0.0
    %979 = vmatpush1.xpose.msra.mxu0 0.0
    %980 = vmatprep.subr.mxu0 0.0
    %981 = vmatpush1.xpose.msra.mxu0 0.0
    %982 = vmatprep.subr.mxu0 0.0
    %983 = vmatpush1.xpose.msra.mxu0 0.0
    %984 = vmatprep.subr.mxu0 0.0
    %985 = vmatpush1.xpose.msra.mxu0 0.0
    %986 = vmatprep.subr.mxu0 0.0
    %987 = vmatpush1.xpose.msra.mxu0 0.0
    %988 = vmatprep.subr.mxu0 0.0
    %989 = vmatpush1.xpose.msra.mxu0 0.0
    %990 = vmatprep.subr.mxu0 0.0
    %991 = vmatpush1.xpose.msra.mxu0 0.0
    %992 = vmatprep.subr.mxu0 0.0
    %993 = vmatpush1.xpose.msra.mxu0 0.0
    %994 = vmatprep.subr.mxu0 0.0
    %995 = vmatpush1.xpose.msra.mxu0 0.0
    %996 = vmatprep.subr.mxu0 0.0
    %997 = vmatpush1.xpose.msra.mxu0 0.0
    %998 = vmatprep.subr.mxu0 0.0
    %999 = vmatpush1.xpose.msra.mxu0 0.0
    %1000 = vmatprep.subr.mxu0 0.0
    %1001 = vmatpush1.xpose.msra.mxu0 0.0
    %1002 = vmatprep.subr.mxu0 0.0
    %1003 = vmatpush1.xpose.msra.mxu0 0.0
    %1004 = vmatprep.subr.mxu0 0.0
    %1005 = vmatpush1.xpose.msra.mxu0 0.0
    %1006 = vmatprep.subr.mxu0 0.0
    %1007 = vmatpush1.xpose.msra.mxu0 0.0
    %1008 = vmatprep.subr.mxu0 0.0
    %1009 = vmatpush1.xpose.msra.mxu0 0.0
    %1010 = vmatprep.subr.mxu0 0.0
    %1011 = vmatpush1.xpose.msra.mxu0 0.0
    %1012 = vmatprep.subr.mxu0 0.0
    %1013 = vmatpush1.xpose.msra.mxu0 0.0
    %1014 = vmatprep.subr.mxu0 0.0
    %1015 = vmatpush1.xpose.msra.mxu0 0.0
    %1016 = vmatprep.subr.mxu0 0.0
    %1017 = vmatpush1.xpose.msra.mxu0 0.0
    %1018 = vmatprep.subr.mxu0 0.0
    %1019 = vmatpush1.xpose.msra.mxu0 0.0
    %1020 = vmatprep.subr.mxu0 0.0
    %1021 = vmatpush1.xpose.msra.mxu0 0.0
    %1022 = vmatprep.subr.mxu0 0.0
    %1023 = vmatpush1.xpose.msra.mxu0 0.0
    %1024 = vmatprep.subr.mxu0 0.0
    %1025 = vmatpush1.xpose.msra.mxu0 0.0
    %1026 = vmatprep.subr.mxu0 0.0
    %1027 = vmatpush1.xpose.msra.mxu0 0.0
    %1028 = vmatprep.subr.mxu0 0.0
    %1029 = vmatpush1.xpose.msra.mxu0 0.0
    %1030 = vmatprep.subr.mxu0 0.0
    %1031 = vmatpush1.xpose.msra.mxu0 0.0
    %1032 = vmatprep.subr.mxu0 0.0
    %1033 = vmatpush1.xpose.msra.mxu0 0.0
    %1034 = vmatprep.subr.mxu0 0.0
    %1035 = vmatpush1.xpose.msra.mxu0 0.0
    %1036 = vmatprep.mubr.f32.mxu0 0.0
    %1037 = vmatmul.mubr.f32.gmra.mrb[0].mxu0 %v970
    %v1038 = vpop.f32.mrb[0].mxu0
    %v1039 = vadd.f32 0.0, %v1038
    %v1040 = vpop.f32.mrb[0].mxu0
    %1041 = vdwg.mxu0
    %v1044 = vsel %vm969, %v957, %v949
    %1046 = vmatprep.subr.mxu0 0.0
    %1047 = vmatpush1.xpose.msra.mxu0 %v965
    %1048 = vmatprep.subr.mxu0 0.0
    %1049 = vmatpush1.xpose.msra.mxu0 0.0
    %1050 = vmatprep.subr.mxu0 0.0
    %1051 = vmatpush1.xpose.msra.mxu0 0.0
    %1052 = vmatprep.subr.mxu0 0.0
    %1053 = vmatpush1.xpose.msra.mxu0 0.0
    %1054 = vmatprep.subr.mxu0 0.0
    %1055 = vmatpush1.xpose.msra.mxu0 0.0
    %1056 = vmatprep.subr.mxu0 0.0
    %1057 = vmatpush1.xpose.msra.mxu0 0.0
    %1058 = vmatprep.subr.mxu0 0.0
    %1059 = vmatpush1.xpose.msra.mxu0 0.0
    %1060 = vmatprep.subr.mxu0 0.0
    %1061 = vmatpush1.xpose.msra.mxu0 0.0
    %1062 = vmatprep.subr.mxu0 0.0
    %1063 = vmatpush1.xpose.msra.mxu0 0.0
    %1064 = vmatprep.subr.mxu0 0.0
    %1065 = vmatpush1.xpose.msra.mxu0 0.0
    %1066 = vmatprep.subr.mxu0 0.0
    %1067 = vmatpush1.xpose.msra.mxu0 0.0
    %1068 = vmatprep.subr.mxu0 0.0
    %1069 = vmatpush1.xpose.msra.mxu0 0.0
    %1070 = vmatprep.subr.mxu0 0.0
    %1071 = vmatpush1.xpose.msra.mxu0 0.0
    %1072 = vmatprep.subr.mxu0 0.0
    %1073 = vmatpush1.xpose.msra.mxu0 0.0
    %1074 = vmatprep.subr.mxu0 0.0
    %1075 = vmatpush1.xpose.msra.mxu0 0.0
    %1076 = vmatprep.subr.mxu0 0.0
    %1077 = vmatpush1.xpose.msra.mxu0 0.0
    %1078 = vmatprep.subr.mxu0 0.0
    %1079 = vmatpush1.xpose.msra.mxu0 0.0
    %1080 = vmatprep.subr.mxu0 0.0
    %1081 = vmatpush1.xpose.msra.mxu0 0.0
    %1082 = vmatprep.subr.mxu0 0.0
    %1083 = vmatpush1.xpose.msra.mxu0 0.0
    %1084 = vmatprep.subr.mxu0 0.0
    %1085 = vmatpush1.xpose.msra.mxu0 0.0
    %1086 = vmatprep.subr.mxu0 0.0
    %1087 = vmatpush1.xpose.msra.mxu0 0.0
    %1088 = vmatprep.subr.mxu0 0.0
    %1089 = vmatpush1.xpose.msra.mxu0 0.0
    %1090 = vmatprep.subr.mxu0 0.0
    %1091 = vmatpush1.xpose.msra.mxu0 0.0
    %1092 = vmatprep.subr.mxu0 0.0
    %1093 = vmatpush1.xpose.msra.mxu0 0.0
    %1094 = vmatprep.subr.mxu0 0.0
    %1095 = vmatpush1.xpose.msra.mxu0 0.0
    %1096 = vmatprep.subr.mxu0 0.0
    %1097 = vmatpush1.xpose.msra.mxu0 0.0
    %1098 = vmatprep.subr.mxu0 0.0
    %1099 = vmatpush1.xpose.msra.mxu0 0.0
    %1100 = vmatprep.subr.mxu0 0.0
    %1101 = vmatpush1.xpose.msra.mxu0 0.0
    %1102 = vmatprep.subr.mxu0 0.0
    %1103 = vmatpush1.xpose.msra.mxu0 0.0
    %1104 = vmatprep.subr.mxu0 0.0
    %1105 = vmatpush1.xpose.msra.mxu0 0.0
    %1106 = vmatprep.subr.mxu0 0.0
    %1107 = vmatpush1.xpose.msra.mxu0 0.0
    %1108 = vmatprep.subr.mxu0 0.0
    %1109 = vmatpush1.xpose.msra.mxu0 0.0
    %1110 = vmatprep.mubr.f32.mxu0 0.0
    %1111 = vmatmul.mubr.f32.gmra.mrb[0].mxu0 %v1044
    %v1112 = vpop.f32.mrb[0].mxu0
    %v1113 = vadd.f32 %v1039, %v1112
    %v1114 = vpop.f32.mrb[0].mxu0
    %1115 = vdwg.mxu0
    %v1116 = vld [vmem:[#allocation8 + $0x4] sm:$0x3]
    %v1119 = vsel %vm969, %v959, %v951
    %1121 = vmatprep.subr.mxu0 0.0
    %1122 = vmatpush1.xpose.msra.mxu0 %v1116
    %1123 = vmatprep.subr.mxu0 0.0
    %1124 = vmatpush1.xpose.msra.mxu0 0.0
    %1125 = vmatprep.subr.mxu0 0.0
    %1126 = vmatpush1.xpose.msra.mxu0 0.0
    %1127 = vmatprep.subr.mxu0 0.0
    %1128 = vmatpush1.xpose.msra.mxu0 0.0
    %1129 = vmatprep.subr.mxu0 0.0
    %1130 = vmatpush1.xpose.msra.mxu0 0.0
    %1131 = vmatprep.subr.mxu0 0.0
    %1132 = vmatpush1.xpose.msra.mxu0 0.0
    %1133 = vmatprep.subr.mxu0 0.0
    %1134 = vmatpush1.xpose.msra.mxu0 0.0
    %1135 = vmatprep.subr.mxu0 0.0
    %1136 = vmatpush1.xpose.msra.mxu0 0.0
    %1137 = vmatprep.subr.mxu0 0.0
    %1138 = vmatpush1.xpose.msra.mxu0 0.0
    %1139 = vmatprep.subr.mxu0 0.0
    %1140 = vmatpush1.xpose.msra.mxu0 0.0
    %1141 = vmatprep.subr.mxu0 0.0
    %1142 = vmatpush1.xpose.msra.mxu0 0.0
    %1143 = vmatprep.subr.mxu0 0.0
    %1144 = vmatpush1.xpose.msra.mxu0 0.0
    %1145 = vmatprep.subr.mxu0 0.0
    %1146 = vmatpush1.xpose.msra.mxu0 0.0
    %1147 = vmatprep.subr.mxu0 0.0
    %1148 = vmatpush1.xpose.msra.mxu0 0.0
    %1149 = vmatprep.subr.mxu0 0.0
    %1150 = vmatpush1.xpose.msra.mxu0 0.0
    %1151 = vmatprep.subr.mxu0 0.0
    %1152 = vmatpush1.xpose.msra.mxu0 0.0
    %1153 = vmatprep.subr.mxu0 0.0
    %1154 = vmatpush1.xpose.msra.mxu0 0.0
    %1155 = vmatprep.subr.mxu0 0.0
    %1156 = vmatpush1.xpose.msra.mxu0 0.0
    %1157 = vmatprep.subr.mxu0 0.0
    %1158 = vmatpush1.xpose.msra.mxu0 0.0
    %1159 = vmatprep.subr.mxu0 0.0
    %1160 = vmatpush1.xpose.msra.mxu0 0.0
    %1161 = vmatprep.subr.mxu0 0.0
    %1162 = vmatpush1.xpose.msra.mxu0 0.0
    %1163 = vmatprep.subr.mxu0 0.0
    %1164 = vmatpush1.xpose.msra.mxu0 0.0
    %1165 = vmatprep.subr.mxu0 0.0
    %1166 = vmatpush1.xpose.msra.mxu0 0.0
    %1167 = vmatprep.subr.mxu0 0.0
    %1168 = vmatpush1.xpose.msra.mxu0 0.0
    %1169 = vmatprep.subr.mxu0 0.0
    %1170 = vmatpush1.xpose.msra.mxu0 0.0
    %1171 = vmatprep.subr.mxu0 0.0
    %1172 = vmatpush1.xpose.msra.mxu0 0.0
    %1173 = vmatprep.subr.mxu0 0.0
    %1174 = vmatpush1.xpose.msra.mxu0 0.0
    %1175 = vmatprep.subr.mxu0 0.0
    %1176 = vmatpush1.xpose.msra.mxu0 0.0
    %1177 = vmatprep.subr.mxu0 0.0
    %1178 = vmatpush1.xpose.msra.mxu0 0.0
    %1179 = vmatprep.subr.mxu0 0.0
    %1180 = vmatpush1.xpose.msra.mxu0 0.0
    %1181 = vmatprep.subr.mxu0 0.0
    %1182 = vmatpush1.xpose.msra.mxu0 0.0
    %1183 = vmatprep.subr.mxu0 0.0
    %1184 = vmatpush1.xpose.msra.mxu0 0.0
    %1185 = vmatprep.mubr.f32.mxu0 0.0
    %1186 = vmatmul.mubr.f32.gmra.mrb[0].mxu0 %v1119
    %v1187 = vpop.f32.mrb[0].mxu0
    %v1188 = vadd.f32 0.0, %v1187
    %v1189 = vpop.f32.mrb[0].mxu0
    %1190 = vdwg.mxu0
    %v1191 = vadd.f32 %v1113, %v1188
    %v1192 = vld [vmem:[#allocation8 + $0x6] sm:$0x3]
    %v1195 = vsel %vm969, %v960, %v952
    %1197 = vmatprep.subr.mxu0 0.0
    %1198 = vmatpush1.xpose.msra.mxu0 %v1192
    %1199 = vmatprep.subr.mxu0 0.0
    %1200 = vmatpush1.xpose.msra.mxu0 0.0
    %1201 = vmatprep.subr.mxu0 0.0
    %1202 = vmatpush1.xpose.msra.mxu0 0.0
    %1203 = vmatprep.subr.mxu0 0.0
    %1204 = vmatpush1.xpose.msra.mxu0 0.0
    %1205 = vmatprep.subr.mxu0 0.0
    %1206 = vmatpush1.xpose.msra.mxu0 0.0
    %1207 = vmatprep.subr.mxu0 0.0
    %1208 = vmatpush1.xpose.msra.mxu0 0.0
    %1209 = vmatprep.subr.mxu0 0.0
    %1210 = vmatpush1.xpose.msra.mxu0 0.0
    %1211 = vmatprep.subr.mxu0 0.0
    %1212 = vmatpush1.xpose.msra.mxu0 0.0
    %1213 = vmatprep.subr.mxu0 0.0
    %1214 = vmatpush1.xpose.msra.mxu0 0.0
    %1215 = vmatprep.subr.mxu0 0.0
    %1216 = vmatpush1.xpose.msra.mxu0 0.0
    %1217 = vmatprep.subr.mxu0 0.0
    %1218 = vmatpush1.xpose.msra.mxu0 0.0
    %1219 = vmatprep.subr.mxu0 0.0
    %1220 = vmatpush1.xpose.msra.mxu0 0.0
    %1221 = vmatprep.subr.mxu0 0.0
    %1222 = vmatpush1.xpose.msra.mxu0 0.0
    %1223 = vmatprep.subr.mxu0 0.0
    %1224 = vmatpush1.xpose.msra.mxu0 0.0
    %1225 = vmatprep.subr.mxu0 0.0
    %1226 = vmatpush1.xpose.msra.mxu0 0.0
    %1227 = vmatprep.subr.mxu0 0.0
    %1228 = vmatpush1.xpose.msra.mxu0 0.0
    %1229 = vmatprep.subr.mxu0 0.0
    %1230 = vmatpush1.xpose.msra.mxu0 0.0
    %1231 = vmatprep.subr.mxu0 0.0
    %1232 = vmatpush1.xpose.msra.mxu0 0.0
    %1233 = vmatprep.subr.mxu0 0.0
    %1234 = vmatpush1.xpose.msra.mxu0 0.0
    %1235 = vmatprep.subr.mxu0 0.0
    %1236 = vmatpush1.xpose.msra.mxu0 0.0
    %1237 = vmatprep.subr.mxu0 0.0
    %1238 = vmatpush1.xpose.msra.mxu0 0.0
    %1239 = vmatprep.subr.mxu0 0.0
    %1240 = vmatpush1.xpose.msra.mxu0 0.0
    %1241 = vmatprep.subr.mxu0 0.0
    %1242 = vmatpush1.xpose.msra.mxu0 0.0
    %1243 = vmatprep.subr.mxu0 0.0
    %1244 = vmatpush1.xpose.msra.mxu0 0.0
    %1245 = vmatprep.subr.mxu0 0.0
    %1246 = vmatpush1.xpose.msra.mxu0 0.0
    %1247 = vmatprep.subr.mxu0 0.0
    %1248 = vmatpush1.xpose.msra.mxu0 0.0
    %1249 = vmatprep.subr.mxu0 0.0
    %1250 = vmatpush1.xpose.msra.mxu0 0.0
    %1251 = vmatprep.subr.mxu0 0.0
    %1252 = vmatpush1.xpose.msra.mxu0 0.0
    %1253 = vmatprep.subr.mxu0 0.0
    %1254 = vmatpush1.xpose.msra.mxu0 0.0
    %1255 = vmatprep.subr.mxu0 0.0
    %1256 = vmatpush1.xpose.msra.mxu0 0.0
    %1257 = vmatprep.subr.mxu0 0.0
    %1258 = vmatpush1.xpose.msra.mxu0 0.0
    %1259 = vmatprep.subr.mxu0 0.0
    %1260 = vmatpush1.xpose.msra.mxu0 0.0
    %1261 = vmatprep.mubr.f32.mxu0 0.0
    %1262 = vmatmul.mubr.f32.gmra.mrb[0].mxu0 %v1195
    %v1263 = vpop.f32.mrb[0].mxu0
    %v1264 = vadd.f32 0.0, %v1263
    %v1265 = vpop.f32.mrb[0].mxu0
    %1266 = vdwg.mxu0
    %v1267 = vadd.f32 %v1191, %v1264
    %v1268 = vld [vmem:[#allocation8 + $0x8] sm:$0x3]
    %v1271 = vsel %vm969, %v961, %v953
    %1273 = vmatprep.subr.mxu0 0.0
    %1274 = vmatpush1.xpose.msra.mxu0 %v1268
    %1275 = vmatprep.subr.mxu0 0.0
    %1276 = vmatpush1.xpose.msra.mxu0 0.0
    %1277 = vmatprep.subr.mxu0 0.0
    %1278 = vmatpush1.xpose.msra.mxu0 0.0
    %1279 = vmatprep.subr.mxu0 0.0
    %1280 = vmatpush1.xpose.msra.mxu0 0.0
    %1281 = vmatprep.subr.mxu0 0.0
    %1282 = vmatpush1.xpose.msra.mxu0 0.0
    %1283 = vmatprep.subr.mxu0 0.0
    %1284 = vmatpush1.xpose.msra.mxu0 0.0
    %1285 = vmatprep.subr.mxu0 0.0
    %1286 = vmatpush1.xpose.msra.mxu0 0.0
    %1287 = vmatprep.subr.mxu0 0.0
    %1288 = vmatpush1.xpose.msra.mxu0 0.0
    %1289 = vmatprep.subr.mxu0 0.0
    %1290 = vmatpush1.xpose.msra.mxu0 0.0
    %1291 = vmatprep.subr.mxu0 0.0
    %1292 = vmatpush1.xpose.msra.mxu0 0.0
    %1293 = vmatprep.subr.mxu0 0.0
    %1294 = vmatpush1.xpose.msra.mxu0 0.0
    %1295 = vmatprep.subr.mxu0 0.0
    %1296 = vmatpush1.xpose.msra.mxu0 0.0
    %1297 = vmatprep.subr.mxu0 0.0
    %1298 = vmatpush1.xpose.msra.mxu0 0.0
    %1299 = vmatprep.subr.mxu0 0.0
    %1300 = vmatpush1.xpose.msra.mxu0 0.0
    %1301 = vmatprep.subr.mxu0 0.0
    %1302 = vmatpush1.xpose.msra.mxu0 0.0
    %1303 = vmatprep.subr.mxu0 0.0
    %1304 = vmatpush1.xpose.msra.mxu0 0.0
    %1305 = vmatprep.subr.mxu0 0.0
    %1306 = vmatpush1.xpose.msra.mxu0 0.0
    %1307 = vmatprep.subr.mxu0 0.0
    %1308 = vmatpush1.xpose.msra.mxu0 0.0
    %1309 = vmatprep.subr.mxu0 0.0
    %1310 = vmatpush1.xpose.msra.mxu0 0.0
    %1311 = vmatprep.subr.mxu0 0.0
    %1312 = vmatpush1.xpose.msra.mxu0 0.0
    %1313 = vmatprep.subr.mxu0 0.0
    %1314 = vmatpush1.xpose.msra.mxu0 0.0
    %1315 = vmatprep.subr.mxu0 0.0
    %1316 = vmatpush1.xpose.msra.mxu0 0.0
    %1317 = vmatprep.subr.mxu0 0.0
    %1318 = vmatpush1.xpose.msra.mxu0 0.0
    %1319 = vmatprep.subr.mxu0 0.0
    %1320 = vmatpush1.xpose.msra.mxu0 0.0
    %1321 = vmatprep.subr.mxu0 0.0
    %1322 = vmatpush1.xpose.msra.mxu0 0.0
    %1323 = vmatprep.subr.mxu0 0.0
    %1324 = vmatpush1.xpose.msra.mxu0 0.0
    %1325 = vmatprep.subr.mxu0 0.0
    %1326 = vmatpush1.xpose.msra.mxu0 0.0
    %1327 = vmatprep.subr.mxu0 0.0
    %1328 = vmatpush1.xpose.msra.mxu0 0.0
    %1329 = vmatprep.subr.mxu0 0.0
    %1330 = vmatpush1.xpose.msra.mxu0 0.0
    %1331 = vmatprep.subr.mxu0 0.0
    %1332 = vmatpush1.xpose.msra.mxu0 0.0
    %1333 = vmatprep.subr.mxu0 0.0
    %1334 = vmatpush1.xpose.msra.mxu0 0.0
    %1335 = vmatprep.subr.mxu0 0.0
    %1336 = vmatpush1.xpose.msra.mxu0 0.0
    %1337 = vmatprep.mubr.f32.mxu0 0.0
    %1338 = vmatmul.mubr.f32.gmra.mrb[0].mxu0 %v1271
    %v1339 = vpop.f32.mrb[0].mxu0
    %v1340 = vadd.f32 0.0, %v1339
    %v1341 = vpop.f32.mrb[0].mxu0
    %1342 = vdwg.mxu0
    %v1343 = vadd.f32 %v1267, %v1340
    %v1344 = vld [vmem:[#allocation8 + $0xa] sm:$0x3]
    %v1347 = vsel %vm969, %v962, %v954
    %1349 = vmatprep.subr.mxu0 0.0
    %1350 = vmatpush1.xpose.msra.mxu0 %v1344
    %1351 = vmatprep.subr.mxu0 0.0
    %1352 = vmatpush1.xpose.msra.mxu0 0.0
    %1353 = vmatprep.subr.mxu0 0.0
    %1354 = vmatpush1.xpose.msra.mxu0 0.0
    %1355 = vmatprep.subr.mxu0 0.0
    %1356 = vmatpush1.xpose.msra.mxu0 0.0
    %1357 = vmatprep.subr.mxu0 0.0
    %1358 = vmatpush1.xpose.msra.mxu0 0.0
    %1359 = vmatprep.subr.mxu0 0.0
    %1360 = vmatpush1.xpose.msra.mxu0 0.0
    %1361 = vmatprep.subr.mxu0 0.0
    %1362 = vmatpush1.xpose.msra.mxu0 0.0
    %1363 = vmatprep.subr.mxu0 0.0
    %1364 = vmatpush1.xpose.msra.mxu0 0.0
    %1365 = vmatprep.subr.mxu0 0.0
    %1366 = vmatpush1.xpose.msra.mxu0 0.0
    %1367 = vmatprep.subr.mxu0 0.0
    %1368 = vmatpush1.xpose.msra.mxu0 0.0
    %1369 = vmatprep.subr.mxu0 0.0
    %1370 = vmatpush1.xpose.msra.mxu0 0.0
    %1371 = vmatprep.subr.mxu0 0.0
    %1372 = vmatpush1.xpose.msra.mxu0 0.0
    %1373 = vmatprep.subr.mxu0 0.0
    %1374 = vmatpush1.xpose.msra.mxu0 0.0
    %1375 = vmatprep.subr.mxu0 0.0
    %1376 = vmatpush1.xpose.msra.mxu0 0.0
    %1377 = vmatprep.subr.mxu0 0.0
    %1378 = vmatpush1.xpose.msra.mxu0 0.0
    %1379 = vmatprep.subr.mxu0 0.0
    %1380 = vmatpush1.xpose.msra.mxu0 0.0
    %1381 = vmatprep.subr.mxu0 0.0
    %1382 = vmatpush1.xpose.msra.mxu0 0.0
    %1383 = vmatprep.subr.mxu0 0.0
    %1384 = vmatpush1.xpose.msra.mxu0 0.0
    %1385 = vmatprep.subr.mxu0 0.0
    %1386 = vmatpush1.xpose.msra.mxu0 0.0
    %1387 = vmatprep.subr.mxu0 0.0
    %1388 = vmatpush1.xpose.msra.mxu0 0.0
    %1389 = vmatprep.subr.mxu0 0.0
    %1390 = vmatpush1.xpose.msra.mxu0 0.0
    %1391 = vmatprep.subr.mxu0 0.0
    %1392 = vmatpush1.xpose.msra.mxu0 0.0
    %1393 = vmatprep.subr.mxu0 0.0
    %1394 = vmatpush1.xpose.msra.mxu0 0.0
    %1395 = vmatprep.subr.mxu0 0.0
    %1396 = vmatpush1.xpose.msra.mxu0 0.0
    %1397 = vmatprep.subr.mxu0 0.0
    %1398 = vmatpush1.xpose.msra.mxu0 0.0
    %1399 = vmatprep.subr.mxu0 0.0
    %1400 = vmatpush1.xpose.msra.mxu0 0.0
    %1401 = vmatprep.subr.mxu0 0.0
    %1402 = vmatpush1.xpose.msra.mxu0 0.0
    %1403 = vmatprep.subr.mxu0 0.0
    %1404 = vmatpush1.xpose.msra.mxu0 0.0
    %1405 = vmatprep.subr.mxu0 0.0
    %1406 = vmatpush1.xpose.msra.mxu0 0.0
    %1407 = vmatprep.subr.mxu0 0.0
    %1408 = vmatpush1.xpose.msra.mxu0 0.0
    %1409 = vmatprep.subr.mxu0 0.0
    %1410 = vmatpush1.xpose.msra.mxu0 0.0
    %1411 = vmatprep.subr.mxu0 0.0
    %1412 = vmatpush1.xpose.msra.mxu0 0.0
    %1413 = vmatprep.mubr.f32.mxu0 0.0
    %1414 = vmatmul.mubr.f32.gmra.mrb[0].mxu0 %v1347
    %v1415 = vpop.f32.mrb[0].mxu0
    %v1416 = vadd.f32 0.0, %v1415
    %v1417 = vpop.f32.mrb[0].mxu0
    %1418 = vdwg.mxu0
    %v1419 = vadd.f32 %v1343, %v1416
    %v1420 = vld [vmem:[#allocation8 + $0xc] sm:$0x3]
    %v1423 = vsel %vm969, %v963, %v955
    %1425 = vmatprep.subr.mxu0 0.0
    %1426 = vmatpush1.xpose.msra.mxu0 %v1420
    %1427 = vmatprep.subr.mxu0 0.0
    %1428 = vmatpush1.xpose.msra.mxu0 0.0
    %1429 = vmatprep.subr.mxu0 0.0
    %1430 = vmatpush1.xpose.msra.mxu0 0.0
    %1431 = vmatprep.subr.mxu0 0.0
    %1432 = vmatpush1.xpose.msra.mxu0 0.0
    %1433 = vmatprep.subr.mxu0 0.0
    %1434 = vmatpush1.xpose.msra.mxu0 0.0
    %1435 = vmatprep.subr.mxu0 0.0
    %1436 = vmatpush1.xpose.msra.mxu0 0.0
    %1437 = vmatprep.subr.mxu0 0.0
    %1438 = vmatpush1.xpose.msra.mxu0 0.0
    %1439 = vmatprep.subr.mxu0 0.0
    %1440 = vmatpush1.xpose.msra.mxu0 0.0
    %1441 = vmatprep.subr.mxu0 0.0
    %1442 = vmatpush1.xpose.msra.mxu0 0.0
    %1443 = vmatprep.subr.mxu0 0.0
    %1444 = vmatpush1.xpose.msra.mxu0 0.0
    %1445 = vmatprep.subr.mxu0 0.0
    %1446 = vmatpush1.xpose.msra.mxu0 0.0
    %1447 = vmatprep.subr.mxu0 0.0
    %1448 = vmatpush1.xpose.msra.mxu0 0.0
    %1449 = vmatprep.subr.mxu0 0.0
    %1450 = vmatpush1.xpose.msra.mxu0 0.0
    %1451 = vmatprep.subr.mxu0 0.0
    %1452 = vmatpush1.xpose.msra.mxu0 0.0
    %1453 = vmatprep.subr.mxu0 0.0
    %1454 = vmatpush1.xpose.msra.mxu0 0.0
    %1455 = vmatprep.subr.mxu0 0.0
    %1456 = vmatpush1.xpose.msra.mxu0 0.0
    %1457 = vmatprep.subr.mxu0 0.0
    %1458 = vmatpush1.xpose.msra.mxu0 0.0
    %1459 = vmatprep.subr.mxu0 0.0
    %1460 = vmatpush1.xpose.msra.mxu0 0.0
    %1461 = vmatprep.subr.mxu0 0.0
    %1462 = vmatpush1.xpose.msra.mxu0 0.0
    %1463 = vmatprep.subr.mxu0 0.0
    %1464 = vmatpush1.xpose.msra.mxu0 0.0
    %1465 = vmatprep.subr.mxu0 0.0
    %1466 = vmatpush1.xpose.msra.mxu0 0.0
    %1467 = vmatprep.subr.mxu0 0.0
    %1468 = vmatpush1.xpose.msra.mxu0 0.0
    %1469 = vmatprep.subr.mxu0 0.0
    %1470 = vmatpush1.xpose.msra.mxu0 0.0
    %1471 = vmatprep.subr.mxu0 0.0
    %1472 = vmatpush1.xpose.msra.mxu0 0.0
    %1473 = vmatprep.subr.mxu0 0.0
    %1474 = vmatpush1.xpose.msra.mxu0 0.0
    %1475 = vmatprep.subr.mxu0 0.0
    %1476 = vmatpush1.xpose.msra.mxu0 0.0
    %1477 = vmatprep.subr.mxu0 0.0
    %1478 = vmatpush1.xpose.msra.mxu0 0.0
    %1479 = vmatprep.subr.mxu0 0.0
    %1480 = vmatpush1.xpose.msra.mxu0 0.0
    %1481 = vmatprep.subr.mxu0 0.0
    %1482 = vmatpush1.xpose.msra.mxu0 0.0
    %1483 = vmatprep.subr.mxu0 0.0
    %1484 = vmatpush1.xpose.msra.mxu0 0.0
    %1485 = vmatprep.subr.mxu0 0.0
    %1486 = vmatpush1.xpose.msra.mxu0 0.0
    %1487 = vmatprep.subr.mxu0 0.0
    %1488 = vmatpush1.xpose.msra.mxu0 0.0
    %1489 = vmatprep.mubr.f32.mxu0 0.0
    %1490 = vmatmul.mubr.f32.gmra.mrb[0].mxu0 %v1423
    %v1491 = vpop.f32.mrb[0].mxu0
    %v1492 = vadd.f32 0.0, %v1491
    %v1493 = vpop.f32.mrb[0].mxu0
    %1494 = vdwg.mxu0
    %v1495 = vadd.f32 %v1419, %v1492
    %v1496 = vld [vmem:[#allocation8 + $0xe] sm:$0x3]
    %v1499 = vsel %vm969, %v964, %v956
    %1501 = vmatprep.subr.mxu0 0.0
    %1502 = vmatpush1.xpose.msra.mxu0 %v1496
    %1503 = vmatprep.subr.mxu0 0.0
    %1504 = vmatpush1.xpose.msra.mxu0 0.0
    %1505 = vmatprep.subr.mxu0 0.0
    %1506 = vmatpush1.xpose.msra.mxu0 0.0
    %1507 = vmatprep.subr.mxu0 0.0
    %1508 = vmatpush1.xpose.msra.mxu0 0.0
    %1509 = vmatprep.subr.mxu0 0.0
    %1510 = vmatpush1.xpose.msra.mxu0 0.0
    %1511 = vmatprep.subr.mxu0 0.0
    %1512 = vmatpush1.xpose.msra.mxu0 0.0
    %1513 = vmatprep.subr.mxu0 0.0
    %1514 = vmatpush1.xpose.msra.mxu0 0.0
    %1515 = vmatprep.subr.mxu0 0.0
    %1516 = vmatpush1.xpose.msra.mxu0 0.0
    %1517 = vmatprep.subr.mxu0 0.0
    %1518 = vmatpush1.xpose.msra.mxu0 0.0
    %1519 = vmatprep.subr.mxu0 0.0
    %1520 = vmatpush1.xpose.msra.mxu0 0.0
    %1521 = vmatprep.subr.mxu0 0.0
    %1522 = vmatpush1.xpose.msra.mxu0 0.0
    %1523 = vmatprep.subr.mxu0 0.0
    %1524 = vmatpush1.xpose.msra.mxu0 0.0
    %1525 = vmatprep.subr.mxu0 0.0
    %1526 = vmatpush1.xpose.msra.mxu0 0.0
    %1527 = vmatprep.subr.mxu0 0.0
    %1528 = vmatpush1.xpose.msra.mxu0 0.0
    %1529 = vmatprep.subr.mxu0 0.0
    %1530 = vmatpush1.xpose.msra.mxu0 0.0
    %1531 = vmatprep.subr.mxu0 0.0
    %1532 = vmatpush1.xpose.msra.mxu0 0.0
    %1533 = vmatprep.subr.mxu0 0.0
    %1534 = vmatpush1.xpose.msra.mxu0 0.0
    %1535 = vmatprep.subr.mxu0 0.0
    %1536 = vmatpush1.xpose.msra.mxu0 0.0
    %1537 = vmatprep.subr.mxu0 0.0
    %1538 = vmatpush1.xpose.msra.mxu0 0.0
    %1539 = vmatprep.subr.mxu0 0.0
    %1540 = vmatpush1.xpose.msra.mxu0 0.0
    %1541 = vmatprep.subr.mxu0 0.0
    %1542 = vmatpush1.xpose.msra.mxu0 0.0
    %1543 = vmatprep.subr.mxu0 0.0
    %1544 = vmatpush1.xpose.msra.mxu0 0.0
    %1545 = vmatprep.subr.mxu0 0.0
    %1546 = vmatpush1.xpose.msra.mxu0 0.0
    %1547 = vmatprep.subr.mxu0 0.0
    %1548 = vmatpush1.xpose.msra.mxu0 0.0
    %1549 = vmatprep.subr.mxu0 0.0
    %1550 = vmatpush1.xpose.msra.mxu0 0.0
    %1551 = vmatprep.subr.mxu0 0.0
    %1552 = vmatpush1.xpose.msra.mxu0 0.0
    %1553 = vmatprep.subr.mxu0 0.0
    %1554 = vmatpush1.xpose.msra.mxu0 0.0
    %1555 = vmatprep.subr.mxu0 0.0
    %1556 = vmatpush1.xpose.msra.mxu0 0.0
    %1557 = vmatprep.subr.mxu0 0.0
    %1558 = vmatpush1.xpose.msra.mxu0 0.0
    %1559 = vmatprep.subr.mxu0 0.0
    %1560 = vmatpush1.xpose.msra.mxu0 0.0
    %1561 = vmatprep.subr.mxu0 0.0
    %1562 = vmatpush1.xpose.msra.mxu0 0.0
    %1563 = vmatprep.subr.mxu0 0.0
    %1564 = vmatpush1.xpose.msra.mxu0 0.0
    %1565 = vmatprep.mubr.f32.mxu0 0.0
    %1566 = vmatmul.mubr.f32.gmra.mrb[0].mxu0 %v1499
    %v1567 = vpop.f32.mrb[0].mxu0
    %v1568 = vadd.f32 0.0, %v1567
    %v1569 = vpop.f32.mrb[0].mxu0
    %1570 = vdwg.mxu0
    %v1571 = vadd.f32 %v1495, %v1568
    %v1572 = vld [vmem:[%s4] sm:$0x1]
    %v1574 = vlaneseq
    %v1575 = vshrl.u32 %v1574, 7
    %v1576 = vsub.s32 0, %v1575
    %v1577 = vrot.slane %v1572, %v1576
    %v1579 = vadd.f32 %v1571, %v1577
    %vm1580 = vcmask 9216
    %1581 = vst.msk [vmem:[#allocation9] sm:$0x3] %vm1580, %v1579
    // Predicated region
    $region34: #{simple_cnn_cancer_forward.1} parent=1 // pred_check
      _
    $region35: #{simple_cnn_cancer_forward.1} parent=1 // pred_check_branch
      %1583 = sbr.rel (0) target = $region37
    $region36: #{simple_cnn_cancer_forward.1} parent=1 // pred_region
      %s1585 = ssub.s32 32, 32
      %1586 = vsyncadd [#allocation5], %s1585
      %s1588 = sshll.u32 [#allocation9], 4
      %s1589 = int_to_ptr.vmem [resolvable:$true] %s1588
      %1591 = dma.vmem_to_hbm [thread:$0]  %s1589, 32, %s5, [#allocation5]
    $region37: #{simple_cnn_cancer_forward.1} parent=1 // pred_fallthru
      _
    // Predicated region
    $region38: #{simple_cnn_cancer_forward.1} parent=1 // pred_check
      _
    $region39: #{simple_cnn_cancer_forward.1} parent=1 // pred_check_branch
      %1593 = sbr.rel (0) target = $region41
    $region40: #{simple_cnn_cancer_forward.1} parent=1 // pred_region
      %1594 = dma.done [#allocation5], 32
    $region41: #{simple_cnn_cancer_forward.1} parent=1 // pred_fallthru
      _
    %1595 = vsyncpa [#allocation4], 1
    %1596 = vsyncpa [#allocation7], 1
    %1597 = vsyncpa [#allocation5], 1

</llo_original>
